<compile_context>
chip_gen: v7x
topology: tpu7x:2x2x1
jax: 0.10.0
libtpu: 0.0.40
codegen_flags: <defaults>
</compile_context>

<pallas_src>
import jax
import jax.numpy as jnp
import numpy as np
from jax import lax
from jax.experimental import pallas as pl
from jax.experimental.pallas import tpu as pltpu


def _pick_time_chunk(T):
    """Largest convenient divisor of T to use as the in-kernel time chunk."""
    for cand in (32, 16, 8, 4, 2, 1):
        if T % cand == 0:
            return cand
    return 1


def _lstm_rec_kernel(gx_ref, whh_ref, out_ref, hn_ref, cn_ref, h_sc, c_sc):
    """Recurrent part of one LSTM layer over one (batch_block, time_chunk) tile.

    gx_ref : (T_CHUNK, Bb, 4H)  precomputed x @ W_ih^T + bias for this tile
    whh_ref: (H, 4H)            W_hh^T (resident, constant index_map)
    out_ref: (T_CHUNK, Bb, H)   per-step hidden output
    hn_ref : (Bb, H)            final hidden state (written at last time chunk)
    cn_ref : (Bb, H)            final cell state   (written at last time chunk)
    h_sc, c_sc: (Bb, H) f32 VMEM carries across the sequential time-chunk grid axis.
    """
    t_chunk = pl.program_id(1)
    n_chunks = pl.num_programs(1)
    H = h_sc.shape[-1]
    T_CHUNK = gx_ref.shape[0]

    @pl.when(t_chunk == 0)
    def _():
        h_sc[...] = jnp.zeros_like(h_sc)
        c_sc[...] = jnp.zeros_like(c_sc)

    def step(s, carry):
        h_prev, c_prev = carry
        # Only the recurrent matmul is on the critical path; the x-projection and
        # bias were hoisted into gx_ref.
        gates = gx_ref[s] + jnp.dot(h_prev, whh_ref[...],
                                    preferred_element_type=jnp.float32)
        # NOTE: gate slices are H-wide; for H not a multiple of 128 this is correct
        # but pays some cross-lane relayout. Padding H to 128 lanes is a further opt.
        i_g = jax.nn.sigmoid(gates[:, 0 * H:1 * H])
        f_g = jax.nn.sigmoid(gates[:, 1 * H:2 * H])
        g_g = jnp.tanh(gates[:, 2 * H:3 * H])
        o_g = jax.nn.sigmoid(gates[:, 3 * H:4 * H])

        c_new = f_g * c_prev + i_g * g_g
        h_new = o_g * jnp.tanh(c_new)
        out_ref[s] = h_new.astype(out_ref.dtype)
        return h_new, c_new

    h_fin, c_fin = lax.fori_loop(
        0, T_CHUNK, step, (h_sc[...], c_sc[...]), unroll=True)

    h_sc[...] = h_fin
    c_sc[...] = c_fin

    @pl.when(t_chunk == n_chunks - 1)
    def _():
        hn_ref[...] = h_fin.astype(hn_ref.dtype)
        cn_ref[...] = c_fin.astype(cn_ref.dtype)


def lstm_layer_pallas(x_tbd, w_ih_t, w_hh_t, bias, *, t_chunk=None):
    """Run one LSTM layer over the full sequence.

    x_tbd : (T, B, D) time-major inputs
    w_ih_t: (D, 4H)   W_ih^T
    w_hh_t: (H, 4H)   W_hh^T
    bias  : (4H,)     b_ih + b_hh
    returns (out (T, B, H), h_n (B, H), c_n (B, H))
    """
    T, B, D = x_tbd.shape
    H = w_hh_t.shape[0]
    if t_chunk is None:
        t_chunk = _pick_time_chunk(T)
    n_t = T // t_chunk
    b_block = B  # whole batch per block (split for megacore sharding if B is large)
    n_b = B // b_block

    # Hoisted input projection: one big MXU-friendly matmul + bias fold (plain XLA).
    gates_x = (x_tbd.reshape(T * B, D).astype(jnp.float32)
               @ w_ih_t.astype(jnp.float32)
               + bias.astype(jnp.float32)).reshape(T, B, 4 * H)

    out_shapes = (
        jax.ShapeDtypeStruct((T, B, H), x_tbd.dtype),
        jax.ShapeDtypeStruct((B, H), x_tbd.dtype),
        jax.ShapeDtypeStruct((B, H), x_tbd.dtype),
    )

    grid_spec = pltpu.PrefetchScalarGridSpec(
        num_scalar_prefetch=0,
        grid=(n_b, n_t),
        in_specs=[
            pl.BlockSpec((t_chunk, b_block, 4 * H), lambda b, t: (t, b, 0)),  # gates_x
            pl.BlockSpec((H, 4 * H), lambda b, t: (0, 0)),                    # W_hh^T
        ],
        out_specs=[
            pl.BlockSpec((t_chunk, b_block, H), lambda b, t: (t, b, 0)),      # out
            pl.BlockSpec((b_block, H), lambda b, t: (b, 0)),                  # h_n
            pl.BlockSpec((b_block, H), lambda b, t: (b, 0)),                  # c_n
        ],
        scratch_shapes=[
            pltpu.VMEM((b_block, H), jnp.float32),   # h carry
            pltpu.VMEM((b_block, H), jnp.float32),   # c carry
        ],
    )

    return pl.pallas_call(
        _lstm_rec_kernel,
        out_shape=out_shapes,
        grid_spec=grid_spec,
        compiler_params=pltpu.CompilerParams(
            # batch blocks independent (megacore-shardable), time is sequential
            dimension_semantics=("parallel", "arbitrary")),
    )(gates_x, w_hh_t)


class ABPEncoderPallas:
    """JAX/Pallas port of ABPEncoder: returns (h_n, c_n), each (n_layers, B, H)."""

    def __init__(self, input_dim, hid_dim, n_layers, dropout, key):
        self.input_dim = input_dim
        self.hid_dim = hid_dim
        self.n_layers = n_layers
        self.dropout = dropout
        # PyTorch LSTM init: U(-k, k) with k = 1/sqrt(hid_dim).
        k = 1.0 / np.sqrt(hid_dim)
        self.params = []
        for layer in range(n_layers):
            in_dim = input_dim if layer == 0 else hid_dim
            key, k1, k2, k3, k4 = jax.random.split(key, 5)
            w_ih = jax.random.uniform(k1, (4 * hid_dim, in_dim), jnp.float32, -k, k)
            w_hh = jax.random.uniform(k2, (4 * hid_dim, hid_dim), jnp.float32, -k, k)
            b_ih = jax.random.uniform(k3, (4 * hid_dim,), jnp.float32, -k, k)
            b_hh = jax.random.uniform(k4, (4 * hid_dim,), jnp.float32, -k, k)
            self.params.append((w_ih, w_hh, b_ih, b_hh))

    def __call__(self, x):
        # x: (B, T, input_dim), batch_first like the PyTorch module.
        # Transpose ONCE to time-major; all layers stay time-major (the module only
        # returns (h_n, c_n), so the sequence output never needs transposing back).
        xt = jnp.transpose(x, (1, 0, 2))  # -> (T, B, D)
        h_list, c_list = [], []
        for layer in range(self.n_layers):
            w_ih, w_hh, b_ih, b_hh = self.params[layer]
            out, h_n, c_n = lstm_layer_pallas(xt, w_ih.T, w_hh.T, b_ih + b_hh)
            # TODO(synk): inter-layer dropout (active only in PyTorch training mode)
            # is omitted; this matches eval-mode semantics.
            xt = out
            h_list.append(h_n)
            c_list.append(c_n)
        return jnp.stack(h_list, axis=0), jnp.stack(c_list, axis=0)


def _lstm_reference(x, params, hid_dim, n_layers):
    """Pure-JAX reference mirroring torch.nn.LSTM (batch_first, eval mode)."""
    B, T, _ = x.shape
    H = hid_dim
    h_ns, c_ns = [], []
    inp = x
    for layer in range(n_layers):
        w_ih, w_hh, b_ih, b_hh = params[layer]
        h = jnp.zeros((B, H), jnp.float32)
        c = jnp.zeros((B, H), jnp.float32)
        outs = []
        for t in range(T):
            g = inp[:, t] @ w_ih.T + h @ w_hh.T + b_ih + b_hh
            i_g = jax.nn.sigmoid(g[:, 0 * H:1 * H])
            f_g = jax.nn.sigmoid(g[:, 1 * H:2 * H])
            g_g = jnp.tanh(g[:, 2 * H:3 * H])
            o_g = jax.nn.sigmoid(g[:, 3 * H:4 * H])
            c = f_g * c + i_g * g_g
            h = o_g * jnp.tanh(c)
            outs.append(h)
        inp = jnp.stack(outs, axis=1)
        h_ns.append(h)
        c_ns.append(c)
    return jnp.stack(h_ns, axis=0), jnp.stack(c_ns, axis=0)


if __name__ == "__main__":
    B, T, input_dim, hid_dim, n_layers = 2, 8, 16, 32, 2
    dropout = 0.0

    key = jax.random.PRNGKey(0)
    key_params, key_x = jax.random.split(key)

    enc = ABPEncoderPallas(input_dim, hid_dim, n_layers, dropout, key_params)
    x = jax.random.normal(key_x, (B, T, input_dim), jnp.float32)

    h_n, c_n = enc(x)
    h_n = jax.block_until_ready(h_n)
    c_n = jax.block_until_ready(c_n)

    assert h_n.shape == (n_layers, B, hid_dim)
    assert c_n.shape == (n_layers, B, hid_dim)

    h_ref, c_ref = _lstm_reference(x, enc.params, hid_dim, n_layers)
    np.testing.assert_allclose(np.asarray(h_n), np.asarray(h_ref), atol=1e-5, rtol=1e-5)
    np.testing.assert_allclose(np.asarray(c_n), np.asarray(c_ref), atol=1e-5, rtol=1e-5)

    print("KERNEL_OK")
</pallas_src>

<mosaic_0001>
module attributes {stable_mosaic.version = 11 : i64} {
  func.func @_lstm_rec_kernel(%arg0: i32, %arg1: i32, %arg2: memref<8x2x128xf32, #tpu.memory_space<vmem>>, %arg3: memref<32x128xf32, #tpu.memory_space<vmem>>, %arg4: memref<8x2x32xf32, #tpu.memory_space<vmem>>, %arg5: memref<2x32xf32, #tpu.memory_space<vmem>>, %arg6: memref<2x32xf32, #tpu.memory_space<vmem>>, %arg7: memref<2x32xf32, #tpu.memory_space<vmem>>, %arg8: memref<2x32xf32, #tpu.memory_space<vmem>>) attributes {dimension_semantics = [#tpu.dimension_semantics<parallel>, #tpu.dimension_semantics<arbitrary>], iteration_bounds = array<i64: 1, 1>, scalar_prefetch = 0 : i64, scratch_operands = 2 : i64, tpu.core_type = #tpu.core_type<tc>, window_params = [{transform_indices = @transform_0, window_bounds = array<i64: 8, 2, 128>}, {pipeline_mode = #tpu.pipeline_mode<synchronous>, transform_indices = @transform_1, window_bounds = array<i64: 32, 128>}, {transform_indices = @transform_2, window_bounds = array<i64: 8, 2, 32>}, {transform_indices = @transform_3, window_bounds = array<i64: 2, 32>}, {transform_indices = @transform_4, window_bounds = array<i64: 2, 32>}]} {
    %c0_i32 = arith.constant 0 : i32
    %0 = arith.cmpi eq, %arg1, %c0_i32 : i32
    %1 = arith.extui %0 : i1 to i32
    %c0_i32_0 = arith.constant 0 : i32
    %2 = arith.cmpi ne, %1, %c0_i32_0 : i32
    scf.if %2 {
      %cst_90 = arith.constant 0.000000e+00 : f32
      %290 = vector.broadcast %cst_90 : f32 to vector<2x32xf32>
      %c0_91 = arith.constant 0 : index
      %c0_92 = arith.constant 0 : index
      %291 = vector.load %arg7[%c0_91, %c0_92] : memref<2x32xf32, #tpu.memory_space<vmem>>, vector<2x32xf32>
      tpu.vector_store %arg7[%c0_91, %c0_92], %290 {strides = array<i32>} : memref<2x32xf32, #tpu.memory_space<vmem>>, vector<2x32xf32>,
      %cst_93 = arith.constant 0.000000e+00 : f32
      %292 = vector.broadcast %cst_93 : f32 to vector<2x32xf32>
      %c0_94 = arith.constant 0 : index
      %c0_95 = arith.constant 0 : index
      %293 = vector.load %arg8[%c0_94, %c0_95] : memref<2x32xf32, #tpu.memory_space<vmem>>, vector<2x32xf32>
      tpu.vector_store %arg8[%c0_94, %c0_95], %292 {strides = array<i32>} : memref<2x32xf32, #tpu.memory_space<vmem>>, vector<2x32xf32>,
    } else {
    }
    %c0 = arith.constant 0 : index
    %c0_1 = arith.constant 0 : index
    %3 = vector.load %arg7[%c0, %c0_1] : memref<2x32xf32, #tpu.memory_space<vmem>>, vector<2x32xf32>
    %c0_2 = arith.constant 0 : index
    %c0_3 = arith.constant 0 : index
    %4 = vector.load %arg8[%c0_2, %c0_3] : memref<2x32xf32, #tpu.memory_space<vmem>>, vector<2x32xf32>
    %c0_i32_4 = arith.constant 0 : i32
    %5 = arith.index_cast %c0_i32_4 : i32 to index
    %c0_5 = arith.constant 0 : index
    %c0_6 = arith.constant 0 : index
    %6 = vector.load %arg2[%5, %c0_5, %c0_6] : memref<8x2x128xf32, #tpu.memory_space<vmem>>, vector<1x2x128xf32>
    %7 = vector.shape_cast %6 : vector<1x2x128xf32> to vector<2x128xf32>
    %c0_7 = arith.constant 0 : index
    %c0_8 = arith.constant 0 : index
    %8 = vector.load %arg3[%c0_7, %c0_8] : memref<32x128xf32, #tpu.memory_space<vmem>>, vector<32x128xf32>
    %cst = arith.constant dense<0.000000e+00> : vector<2x128xf32>
    %9 = tpu.matmul %3, %8, %cst {dimension_numbers = #tpu.dot_dimension_numbers<[1], [0], [0], [1], [0, 0, 1, 1], [], []>} : vector<2x32xf32>, vector<32x128xf32>, vector<2x128xf32> -> vector<2x128xf32>
    %10 = arith.addf %7, %9 : vector<2x128xf32>
    %11 = vector.extract_strided_slice %10 {offsets = [0, 0], sizes = [2, 32], strides = [1, 1]} : vector<2x128xf32> to vector<2x32xf32>
    %12 = arith.negf %11 : vector<2x32xf32>
    %13 = math.exp %12 : vector<2x32xf32>
    %cst_9 = arith.constant 1.000000e+00 : f32
    %14 = vector.broadcast %cst_9 : f32 to vector<2x32xf32>
    %15 = arith.addf %14, %13 : vector<2x32xf32>
    %16 = arith.divf %14, %15 : vector<2x32xf32>
    %17 = vector.extract_strided_slice %10 {offsets = [0, 32], sizes = [2, 32], strides = [1, 1]} : vector<2x128xf32> to vector<2x32xf32>
    %18 = arith.negf %17 : vector<2x32xf32>
    %19 = math.exp %18 : vector<2x32xf32>
    %cst_10 = arith.constant 1.000000e+00 : f32
    %20 = vector.broadcast %cst_10 : f32 to vector<2x32xf32>
    %21 = arith.addf %20, %19 : vector<2x32xf32>
    %22 = arith.divf %20, %21 : vector<2x32xf32>
    %23 = vector.extract_strided_slice %10 {offsets = [0, 64], sizes = [2, 32], strides = [1, 1]} : vector<2x128xf32> to vector<2x32xf32>
    %24 = math.tanh %23 : vector<2x32xf32>
    %25 = vector.extract_strided_slice %10 {offsets = [0, 96], sizes = [2, 32], strides = [1, 1]} : vector<2x128xf32> to vector<2x32xf32>
    %26 = arith.negf %25 : vector<2x32xf32>
    %27 = math.exp %26 : vector<2x32xf32>
    %cst_11 = arith.constant 1.000000e+00 : f32
    %28 = vector.broadcast %cst_11 : f32 to vector<2x32xf32>
    %29 = arith.addf %28, %27 : vector<2x32xf32>
    %30 = arith.divf %28, %29 : vector<2x32xf32>
    %31 = arith.mulf %22, %4 : vector<2x32xf32>
    %32 = arith.mulf %16, %24 : vector<2x32xf32>
    %33 = arith.addf %31, %32 : vector<2x32xf32>
    %34 = math.tanh %33 : vector<2x32xf32>
    %35 = arith.mulf %30, %34 : vector<2x32xf32>
    %36 = arith.index_cast %c0_i32_4 : i32 to index
    %c0_12 = arith.constant 0 : index
    %c0_13 = arith.constant 0 : index
    %37 = vector.load %arg4[%36, %c0_12, %c0_13] : memref<8x2x32xf32, #tpu.memory_space<vmem>>, vector<1x2x32xf32>
    %38 = vector.shape_cast %37 : vector<1x2x32xf32> to vector<2x32xf32>
    %39 = vector.shape_cast %35 : vector<2x32xf32> to vector<1x2x32xf32>
    tpu.vector_store %arg4[%36, %c0_12, %c0_13], %39 {strides = array<i32>} : memref<8x2x32xf32, #tpu.memory_space<vmem>>, vector<1x2x32xf32>,
    %c1_i32 = arith.constant 1 : i32
    %40 = arith.index_cast %c1_i32 : i32 to index
    %c0_14 = arith.constant 0 : index
    %c0_15 = arith.constant 0 : index
    %41 = vector.load %arg2[%40, %c0_14, %c0_15] : memref<8x2x128xf32, #tpu.memory_space<vmem>>, vector<1x2x128xf32>
    %42 = vector.shape_cast %41 : vector<1x2x128xf32> to vector<2x128xf32>
    %c0_16 = arith.constant 0 : index
    %c0_17 = arith.constant 0 : index
    %43 = vector.load %arg3[%c0_16, %c0_17] : memref<32x128xf32, #tpu.memory_space<vmem>>, vector<32x128xf32>
    %cst_18 = arith.constant dense<0.000000e+00> : vector<2x128xf32>
    %44 = tpu.matmul %35, %43, %cst_18 {dimension_numbers = #tpu.dot_dimension_numbers<[1], [0], [0], [1], [0, 0, 1, 1], [], []>} : vector<2x32xf32>, vector<32x128xf32>, vector<2x128xf32> -> vector<2x128xf32>
    %45 = arith.addf %42, %44 : vector<2x128xf32>
    %46 = vector.extract_strided_slice %45 {offsets = [0, 0], sizes = [2, 32], strides = [1, 1]} : vector<2x128xf32> to vector<2x32xf32>
    %47 = arith.negf %46 : vector<2x32xf32>
    %48 = math.exp %47 : vector<2x32xf32>
    %cst_19 = arith.constant 1.000000e+00 : f32
    %49 = vector.broadcast %cst_19 : f32 to vector<2x32xf32>
    %50 = arith.addf %49, %48 : vector<2x32xf32>
    %51 = arith.divf %49, %50 : vector<2x32xf32>
    %52 = vector.extract_strided_slice %45 {offsets = [0, 32], sizes = [2, 32], strides = [1, 1]} : vector<2x128xf32> to vector<2x32xf32>
    %53 = arith.negf %52 : vector<2x32xf32>
    %54 = math.exp %53 : vector<2x32xf32>
    %cst_20 = arith.constant 1.000000e+00 : f32
    %55 = vector.broadcast %cst_20 : f32 to vector<2x32xf32>
    %56 = arith.addf %55, %54 : vector<2x32xf32>
    %57 = arith.divf %55, %56 : vector<2x32xf32>
    %58 = vector.extract_strided_slice %45 {offsets = [0, 64], sizes = [2, 32], strides = [1, 1]} : vector<2x128xf32> to vector<2x32xf32>
    %59 = math.tanh %58 : vector<2x32xf32>
    %60 = vector.extract_strided_slice %45 {offsets = [0, 96], sizes = [2, 32], strides = [1, 1]} : vector<2x128xf32> to vector<2x32xf32>
    %61 = arith.negf %60 : vector<2x32xf32>
    %62 = math.exp %61 : vector<2x32xf32>
    %cst_21 = arith.constant 1.000000e+00 : f32
    %63 = vector.broadcast %cst_21 : f32 to vector<2x32xf32>
    %64 = arith.addf %63, %62 : vector<2x32xf32>
    %65 = arith.divf %63, %64 : vector<2x32xf32>
    %66 = arith.mulf %57, %33 : vector<2x32xf32>
    %67 = arith.mulf %51, %59 : vector<2x32xf32>
    %68 = arith.addf %66, %67 : vector<2x32xf32>
    %69 = math.tanh %68 : vector<2x32xf32>
    %70 = arith.mulf %65, %69 : vector<2x32xf32>
    %71 = arith.index_cast %c1_i32 : i32 to index
    %c0_22 = arith.constant 0 : index
    %c0_23 = arith.constant 0 : index
    %72 = vector.load %arg4[%71, %c0_22, %c0_23] : memref<8x2x32xf32, #tpu.memory_space<vmem>>, vector<1x2x32xf32>
    %73 = vector.shape_cast %72 : vector<1x2x32xf32> to vector<2x32xf32>
    %74 = vector.shape_cast %70 : vector<2x32xf32> to vector<1x2x32xf32>
    tpu.vector_store %arg4[%71, %c0_22, %c0_23], %74 {strides = array<i32>} : memref<8x2x32xf32, #tpu.memory_space<vmem>>, vector<1x2x32xf32>,
    %c2_i32 = arith.constant 2 : i32
    %75 = arith.index_cast %c2_i32 : i32 to index
    %c0_24 = arith.constant 0 : index
    %c0_25 = arith.constant 0 : index
    %76 = vector.load %arg2[%75, %c0_24, %c0_25] : memref<8x2x128xf32, #tpu.memory_space<vmem>>, vector<1x2x128xf32>
    %77 = vector.shape_cast %76 : vector<1x2x128xf32> to vector<2x128xf32>
    %c0_26 = arith.constant 0 : index
    %c0_27 = arith.constant 0 : index
    %78 = vector.load %arg3[%c0_26, %c0_27] : memref<32x128xf32, #tpu.memory_space<vmem>>, vector<32x128xf32>
    %cst_28 = arith.constant dense<0.000000e+00> : vector<2x128xf32>
    %79 = tpu.matmul %70, %78, %cst_28 {dimension_numbers = #tpu.dot_dimension_numbers<[1], [0], [0], [1], [0, 0, 1, 1], [], []>} : vector<2x32xf32>, vector<32x128xf32>, vector<2x128xf32> -> vector<2x128xf32>
    %80 = arith.addf %77, %79 : vector<2x128xf32>
    %81 = vector.extract_strided_slice %80 {offsets = [0, 0], sizes = [2, 32], strides = [1, 1]} : vector<2x128xf32> to vector<2x32xf32>
    %82 = arith.negf %81 : vector<2x32xf32>
    %83 = math.exp %82 : vector<2x32xf32>
    %cst_29 = arith.constant 1.000000e+00 : f32
    %84 = vector.broadcast %cst_29 : f32 to vector<2x32xf32>
    %85 = arith.addf %84, %83 : vector<2x32xf32>
    %86 = arith.divf %84, %85 : vector<2x32xf32>
    %87 = vector.extract_strided_slice %80 {offsets = [0, 32], sizes = [2, 32], strides = [1, 1]} : vector<2x128xf32> to vector<2x32xf32>
    %88 = arith.negf %87 : vector<2x32xf32>
    %89 = math.exp %88 : vector<2x32xf32>
    %cst_30 = arith.constant 1.000000e+00 : f32
    %90 = vector.broadcast %cst_30 : f32 to vector<2x32xf32>
    %91 = arith.addf %90, %89 : vector<2x32xf32>
    %92 = arith.divf %90, %91 : vector<2x32xf32>
    %93 = vector.extract_strided_slice %80 {offsets = [0, 64], sizes = [2, 32], strides = [1, 1]} : vector<2x128xf32> to vector<2x32xf32>
    %94 = math.tanh %93 : vector<2x32xf32>
    %95 = vector.extract_strided_slice %80 {offsets = [0, 96], sizes = [2, 32], strides = [1, 1]} : vector<2x128xf32> to vector<2x32xf32>
    %96 = arith.negf %95 : vector<2x32xf32>
    %97 = math.exp %96 : vector<2x32xf32>
    %cst_31 = arith.constant 1.000000e+00 : f32
    %98 = vector.broadcast %cst_31 : f32 to vector<2x32xf32>
    %99 = arith.addf %98, %97 : vector<2x32xf32>
    %100 = arith.divf %98, %99 : vector<2x32xf32>
    %101 = arith.mulf %92, %68 : vector<2x32xf32>
    %102 = arith.mulf %86, %94 : vector<2x32xf32>
    %103 = arith.addf %101, %102 : vector<2x32xf32>
    %104 = math.tanh %103 : vector<2x32xf32>
    %105 = arith.mulf %100, %104 : vector<2x32xf32>
    %106 = arith.index_cast %c2_i32 : i32 to index
    %c0_32 = arith.constant 0 : index
    %c0_33 = arith.constant 0 : index
    %107 = vector.load %arg4[%106, %c0_32, %c0_33] : memref<8x2x32xf32, #tpu.memory_space<vmem>>, vector<1x2x32xf32>
    %108 = vector.shape_cast %107 : vector<1x2x32xf32> to vector<2x32xf32>
    %109 = vector.shape_cast %105 : vector<2x32xf32> to vector<1x2x32xf32>
    tpu.vector_store %arg4[%106, %c0_32, %c0_33], %109 {strides = array<i32>} : memref<8x2x32xf32, #tpu.memory_space<vmem>>, vector<1x2x32xf32>,
    %c3_i32 = arith.constant 3 : i32
    %110 = arith.index_cast %c3_i32 : i32 to index
    %c0_34 = arith.constant 0 : index
    %c0_35 = arith.constant 0 : index
    %111 = vector.load %arg2[%110, %c0_34, %c0_35] : memref<8x2x128xf32, #tpu.memory_space<vmem>>, vector<1x2x128xf32>
    %112 = vector.shape_cast %111 : vector<1x2x128xf32> to vector<2x128xf32>
    %c0_36 = arith.constant 0 : index
    %c0_37 = arith.constant 0 : index
    %113 = vector.load %arg3[%c0_36, %c0_37] : memref<32x128xf32, #tpu.memory_space<vmem>>, vector<32x128xf32>
    %cst_38 = arith.constant dense<0.000000e+00> : vector<2x128xf32>
    %114 = tpu.matmul %105, %113, %cst_38 {dimension_numbers = #tpu.dot_dimension_numbers<[1], [0], [0], [1], [0, 0, 1, 1], [], []>} : vector<2x32xf32>, vector<32x128xf32>, vector<2x128xf32> -> vector<2x128xf32>
    %115 = arith.addf %112, %114 : vector<2x128xf32>
    %116 = vector.extract_strided_slice %115 {offsets = [0, 0], sizes = [2, 32], strides = [1, 1]} : vector<2x128xf32> to vector<2x32xf32>
    %117 = arith.negf %116 : vector<2x32xf32>
    %118 = math.exp %117 : vector<2x32xf32>
    %cst_39 = arith.constant 1.000000e+00 : f32
    %119 = vector.broadcast %cst_39 : f32 to vector<2x32xf32>
    %120 = arith.addf %119, %118 : vector<2x32xf32>
    %121 = arith.divf %119, %120 : vector<2x32xf32>
    %122 = vector.extract_strided_slice %115 {offsets = [0, 32], sizes = [2, 32], strides = [1, 1]} : vector<2x128xf32> to vector<2x32xf32>
    %123 = arith.negf %122 : vector<2x32xf32>
    %124 = math.exp %123 : vector<2x32xf32>
    %cst_40 = arith.constant 1.000000e+00 : f32
    %125 = vector.broadcast %cst_40 : f32 to vector<2x32xf32>
    %126 = arith.addf %125, %124 : vector<2x32xf32>
    %127 = arith.divf %125, %126 : vector<2x32xf32>
    %128 = vector.extract_strided_slice %115 {offsets = [0, 64], sizes = [2, 32], strides = [1, 1]} : vector<2x128xf32> to vector<2x32xf32>
    %129 = math.tanh %128 : vector<2x32xf32>
    %130 = vector.extract_strided_slice %115 {offsets = [0, 96], sizes = [2, 32], strides = [1, 1]} : vector<2x128xf32> to vector<2x32xf32>
    %131 = arith.negf %130 : vector<2x32xf32>
    %132 = math.exp %131 : vector<2x32xf32>
    %cst_41 = arith.constant 1.000000e+00 : f32
    %133 = vector.broadcast %cst_41 : f32 to vector<2x32xf32>
    %134 = arith.addf %133, %132 : vector<2x32xf32>
    %135 = arith.divf %133, %134 : vector<2x32xf32>
    %136 = arith.mulf %127, %103 : vector<2x32xf32>
    %137 = arith.mulf %121, %129 : vector<2x32xf32>
    %138 = arith.addf %136, %137 : vector<2x32xf32>
    %139 = math.tanh %138 : vector<2x32xf32>
    %140 = arith.mulf %135, %139 : vector<2x32xf32>
    %141 = arith.index_cast %c3_i32 : i32 to index
    %c0_42 = arith.constant 0 : index
    %c0_43 = arith.constant 0 : index
    %142 = vector.load %arg4[%141, %c0_42, %c0_43] : memref<8x2x32xf32, #tpu.memory_space<vmem>>, vector<1x2x32xf32>
    %143 = vector.shape_cast %142 : vector<1x2x32xf32> to vector<2x32xf32>
    %144 = vector.shape_cast %140 : vector<2x32xf32> to vector<1x2x32xf32>
    tpu.vector_store %arg4[%141, %c0_42, %c0_43], %144 {strides = array<i32>} : memref<8x2x32xf32, #tpu.memory_space<vmem>>, vector<1x2x32xf32>,
    %c4_i32 = arith.constant 4 : i32
    %145 = arith.index_cast %c4_i32 : i32 to index
    %c0_44 = arith.constant 0 : index
    %c0_45 = arith.constant 0 : index
    %146 = vector.load %arg2[%145, %c0_44, %c0_45] : memref<8x2x128xf32, #tpu.memory_space<vmem>>, vector<1x2x128xf32>
    %147 = vector.shape_cast %146 : vector<1x2x128xf32> to vector<2x128xf32>
    %c0_46 = arith.constant 0 : index
    %c0_47 = arith.constant 0 : index
    %148 = vector.load %arg3[%c0_46, %c0_47] : memref<32x128xf32, #tpu.memory_space<vmem>>, vector<32x128xf32>
    %cst_48 = arith.constant dense<0.000000e+00> : vector<2x128xf32>
    %149 = tpu.matmul %140, %148, %cst_48 {dimension_numbers = #tpu.dot_dimension_numbers<[1], [0], [0], [1], [0, 0, 1, 1], [], []>} : vector<2x32xf32>, vector<32x128xf32>, vector<2x128xf32> -> vector<2x128xf32>
    %150 = arith.addf %147, %149 : vector<2x128xf32>
    %151 = vector.extract_strided_slice %150 {offsets = [0, 0], sizes = [2, 32], strides = [1, 1]} : vector<2x128xf32> to vector<2x32xf32>
    %152 = arith.negf %151 : vector<2x32xf32>
    %153 = math.exp %152 : vector<2x32xf32>
    %cst_49 = arith.constant 1.000000e+00 : f32
    %154 = vector.broadcast %cst_49 : f32 to vector<2x32xf32>
    %155 = arith.addf %154, %153 : vector<2x32xf32>
    %156 = arith.divf %154, %155 : vector<2x32xf32>
    %157 = vector.extract_strided_slice %150 {offsets = [0, 32], sizes = [2, 32], strides = [1, 1]} : vector<2x128xf32> to vector<2x32xf32>
    %158 = arith.negf %157 : vector<2x32xf32>
    %159 = math.exp %158 : vector<2x32xf32>
    %cst_50 = arith.constant 1.000000e+00 : f32
    %160 = vector.broadcast %cst_50 : f32 to vector<2x32xf32>
    %161 = arith.addf %160, %159 : vector<2x32xf32>
    %162 = arith.divf %160, %161 : vector<2x32xf32>
    %163 = vector.extract_strided_slice %150 {offsets = [0, 64], sizes = [2, 32], strides = [1, 1]} : vector<2x128xf32> to vector<2x32xf32>
    %164 = math.tanh %163 : vector<2x32xf32>
    %165 = vector.extract_strided_slice %150 {offsets = [0, 96], sizes = [2, 32], strides = [1, 1]} : vector<2x128xf32> to vector<2x32xf32>
    %166 = arith.negf %165 : vector<2x32xf32>
    %167 = math.exp %166 : vector<2x32xf32>
    %cst_51 = arith.constant 1.000000e+00 : f32
    %168 = vector.broadcast %cst_51 : f32 to vector<2x32xf32>
    %169 = arith.addf %168, %167 : vector<2x32xf32>
    %170 = arith.divf %168, %169 : vector<2x32xf32>
    %171 = arith.mulf %162, %138 : vector<2x32xf32>
    %172 = arith.mulf %156, %164 : vector<2x32xf32>
    %173 = arith.addf %171, %172 : vector<2x32xf32>
    %174 = math.tanh %173 : vector<2x32xf32>
    %175 = arith.mulf %170, %174 : vector<2x32xf32>
    %176 = arith.index_cast %c4_i32 : i32 to index
    %c0_52 = arith.constant 0 : index
    %c0_53 = arith.constant 0 : index
    %177 = vector.load %arg4[%176, %c0_52, %c0_53] : memref<8x2x32xf32, #tpu.memory_space<vmem>>, vector<1x2x32xf32>
    %178 = vector.shape_cast %177 : vector<1x2x32xf32> to vector<2x32xf32>
    %179 = vector.shape_cast %175 : vector<2x32xf32> to vector<1x2x32xf32>
    tpu.vector_store %arg4[%176, %c0_52, %c0_53], %179 {strides = array<i32>} : memref<8x2x32xf32, #tpu.memory_space<vmem>>, vector<1x2x32xf32>,
    %c5_i32 = arith.constant 5 : i32
    %180 = arith.index_cast %c5_i32 : i32 to index
    %c0_54 = arith.constant 0 : index
    %c0_55 = arith.constant 0 : index
    %181 = vector.load %arg2[%180, %c0_54, %c0_55] : memref<8x2x128xf32, #tpu.memory_space<vmem>>, vector<1x2x128xf32>
    %182 = vector.shape_cast %181 : vector<1x2x128xf32> to vector<2x128xf32>
    %c0_56 = arith.constant 0 : index
    %c0_57 = arith.constant 0 : index
    %183 = vector.load %arg3[%c0_56, %c0_57] : memref<32x128xf32, #tpu.memory_space<vmem>>, vector<32x128xf32>
    %cst_58 = arith.constant dense<0.000000e+00> : vector<2x128xf32>
    %184 = tpu.matmul %175, %183, %cst_58 {dimension_numbers = #tpu.dot_dimension_numbers<[1], [0], [0], [1], [0, 0, 1, 1], [], []>} : vector<2x32xf32>, vector<32x128xf32>, vector<2x128xf32> -> vector<2x128xf32>
    %185 = arith.addf %182, %184 : vector<2x128xf32>
    %186 = vector.extract_strided_slice %185 {offsets = [0, 0], sizes = [2, 32], strides = [1, 1]} : vector<2x128xf32> to vector<2x32xf32>
    %187 = arith.negf %186 : vector<2x32xf32>
    %188 = math.exp %187 : vector<2x32xf32>
    %cst_59 = arith.constant 1.000000e+00 : f32
    %189 = vector.broadcast %cst_59 : f32 to vector<2x32xf32>
    %190 = arith.addf %189, %188 : vector<2x32xf32>
    %191 = arith.divf %189, %190 : vector<2x32xf32>
    %192 = vector.extract_strided_slice %185 {offsets = [0, 32], sizes = [2, 32], strides = [1, 1]} : vector<2x128xf32> to vector<2x32xf32>
    %193 = arith.negf %192 : vector<2x32xf32>
    %194 = math.exp %193 : vector<2x32xf32>
    %cst_60 = arith.constant 1.000000e+00 : f32
    %195 = vector.broadcast %cst_60 : f32 to vector<2x32xf32>
    %196 = arith.addf %195, %194 : vector<2x32xf32>
    %197 = arith.divf %195, %196 : vector<2x32xf32>
    %198 = vector.extract_strided_slice %185 {offsets = [0, 64], sizes = [2, 32], strides = [1, 1]} : vector<2x128xf32> to vector<2x32xf32>
    %199 = math.tanh %198 : vector<2x32xf32>
    %200 = vector.extract_strided_slice %185 {offsets = [0, 96], sizes = [2, 32], strides = [1, 1]} : vector<2x128xf32> to vector<2x32xf32>
    %201 = arith.negf %200 : vector<2x32xf32>
    %202 = math.exp %201 : vector<2x32xf32>
    %cst_61 = arith.constant 1.000000e+00 : f32
    %203 = vector.broadcast %cst_61 : f32 to vector<2x32xf32>
    %204 = arith.addf %203, %202 : vector<2x32xf32>
    %205 = arith.divf %203, %204 : vector<2x32xf32>
    %206 = arith.mulf %197, %173 : vector<2x32xf32>
    %207 = arith.mulf %191, %199 : vector<2x32xf32>
    %208 = arith.addf %206, %207 : vector<2x32xf32>
    %209 = math.tanh %208 : vector<2x32xf32>
    %210 = arith.mulf %205, %209 : vector<2x32xf32>
    %211 = arith.index_cast %c5_i32 : i32 to index
    %c0_62 = arith.constant 0 : index
    %c0_63 = arith.constant 0 : index
    %212 = vector.load %arg4[%211, %c0_62, %c0_63] : memref<8x2x32xf32, #tpu.memory_space<vmem>>, vector<1x2x32xf32>
    %213 = vector.shape_cast %212 : vector<1x2x32xf32> to vector<2x32xf32>
    %214 = vector.shape_cast %210 : vector<2x32xf32> to vector<1x2x32xf32>
    tpu.vector_store %arg4[%211, %c0_62, %c0_63], %214 {strides = array<i32>} : memref<8x2x32xf32, #tpu.memory_space<vmem>>, vector<1x2x32xf32>,
    %c6_i32 = arith.constant 6 : i32
    %215 = arith.index_cast %c6_i32 : i32 to index
    %c0_64 = arith.constant 0 : index
    %c0_65 = arith.constant 0 : index
    %216 = vector.load %arg2[%215, %c0_64, %c0_65] : memref<8x2x128xf32, #tpu.memory_space<vmem>>, vector<1x2x128xf32>
    %217 = vector.shape_cast %216 : vector<1x2x128xf32> to vector<2x128xf32>
    %c0_66 = arith.constant 0 : index
    %c0_67 = arith.constant 0 : index
    %218 = vector.load %arg3[%c0_66, %c0_67] : memref<32x128xf32, #tpu.memory_space<vmem>>, vector<32x128xf32>
    %cst_68 = arith.constant dense<0.000000e+00> : vector<2x128xf32>
    %219 = tpu.matmul %210, %218, %cst_68 {dimension_numbers = #tpu.dot_dimension_numbers<[1], [0], [0], [1], [0, 0, 1, 1], [], []>} : vector<2x32xf32>, vector<32x128xf32>, vector<2x128xf32> -> vector<2x128xf32>
    %220 = arith.addf %217, %219 : vector<2x128xf32>
    %221 = vector.extract_strided_slice %220 {offsets = [0, 0], sizes = [2, 32], strides = [1, 1]} : vector<2x128xf32> to vector<2x32xf32>
    %222 = arith.negf %221 : vector<2x32xf32>
    %223 = math.exp %222 : vector<2x32xf32>
    %cst_69 = arith.constant 1.000000e+00 : f32
    %224 = vector.broadcast %cst_69 : f32 to vector<2x32xf32>
    %225 = arith.addf %224, %223 : vector<2x32xf32>
    %226 = arith.divf %224, %225 : vector<2x32xf32>
    %227 = vector.extract_strided_slice %220 {offsets = [0, 32], sizes = [2, 32], strides = [1, 1]} : vector<2x128xf32> to vector<2x32xf32>
    %228 = arith.negf %227 : vector<2x32xf32>
    %229 = math.exp %228 : vector<2x32xf32>
    %cst_70 = arith.constant 1.000000e+00 : f32
    %230 = vector.broadcast %cst_70 : f32 to vector<2x32xf32>
    %231 = arith.addf %230, %229 : vector<2x32xf32>
    %232 = arith.divf %230, %231 : vector<2x32xf32>
    %233 = vector.extract_strided_slice %220 {offsets = [0, 64], sizes = [2, 32], strides = [1, 1]} : vector<2x128xf32> to vector<2x32xf32>
    %234 = math.tanh %233 : vector<2x32xf32>
    %235 = vector.extract_strided_slice %220 {offsets = [0, 96], sizes = [2, 32], strides = [1, 1]} : vector<2x128xf32> to vector<2x32xf32>
    %236 = arith.negf %235 : vector<2x32xf32>
    %237 = math.exp %236 : vector<2x32xf32>
    %cst_71 = arith.constant 1.000000e+00 : f32
    %238 = vector.broadcast %cst_71 : f32 to vector<2x32xf32>
    %239 = arith.addf %238, %237 : vector<2x32xf32>
    %240 = arith.divf %238, %239 : vector<2x32xf32>
    %241 = arith.mulf %232, %208 : vector<2x32xf32>
    %242 = arith.mulf %226, %234 : vector<2x32xf32>
    %243 = arith.addf %241, %242 : vector<2x32xf32>
    %244 = math.tanh %243 : vector<2x32xf32>
    %245 = arith.mulf %240, %244 : vector<2x32xf32>
    %246 = arith.index_cast %c6_i32 : i32 to index
    %c0_72 = arith.constant 0 : index
    %c0_73 = arith.constant 0 : index
    %247 = vector.load %arg4[%246, %c0_72, %c0_73] : memref<8x2x32xf32, #tpu.memory_space<vmem>>, vector<1x2x32xf32>
    %248 = vector.shape_cast %247 : vector<1x2x32xf32> to vector<2x32xf32>
    %249 = vector.shape_cast %245 : vector<2x32xf32> to vector<1x2x32xf32>
    tpu.vector_store %arg4[%246, %c0_72, %c0_73], %249 {strides = array<i32>} : memref<8x2x32xf32, #tpu.memory_space<vmem>>, vector<1x2x32xf32>,
    %c7_i32 = arith.constant 7 : i32
    %250 = arith.index_cast %c7_i32 : i32 to index
    %c0_74 = arith.constant 0 : index
    %c0_75 = arith.constant 0 : index
    %251 = vector.load %arg2[%250, %c0_74, %c0_75] : memref<8x2x128xf32, #tpu.memory_space<vmem>>, vector<1x2x128xf32>
    %252 = vector.shape_cast %251 : vector<1x2x128xf32> to vector<2x128xf32>
    %c0_76 = arith.constant 0 : index
    %c0_77 = arith.constant 0 : index
    %253 = vector.load %arg3[%c0_76, %c0_77] : memref<32x128xf32, #tpu.memory_space<vmem>>, vector<32x128xf32>
    %cst_78 = arith.constant dense<0.000000e+00> : vector<2x128xf32>
    %254 = tpu.matmul %245, %253, %cst_78 {dimension_numbers = #tpu.dot_dimension_numbers<[1], [0], [0], [1], [0, 0, 1, 1], [], []>} : vector<2x32xf32>, vector<32x128xf32>, vector<2x128xf32> -> vector<2x128xf32>
    %255 = arith.addf %252, %254 : vector<2x128xf32>
    %256 = vector.extract_strided_slice %255 {offsets = [0, 0], sizes = [2, 32], strides = [1, 1]} : vector<2x128xf32> to vector<2x32xf32>
    %257 = arith.negf %256 : vector<2x32xf32>
    %258 = math.exp %257 : vector<2x32xf32>
    %cst_79 = arith.constant 1.000000e+00 : f32
    %259 = vector.broadcast %cst_79 : f32 to vector<2x32xf32>
    %260 = arith.addf %259, %258 : vector<2x32xf32>
    %261 = arith.divf %259, %260 : vector<2x32xf32>
    %262 = vector.extract_strided_slice %255 {offsets = [0, 32], sizes = [2, 32], strides = [1, 1]} : vector<2x128xf32> to vector<2x32xf32>
    %263 = arith.negf %262 : vector<2x32xf32>
    %264 = math.exp %263 : vector<2x32xf32>
    %cst_80 = arith.constant 1.000000e+00 : f32
    %265 = vector.broadcast %cst_80 : f32 to vector<2x32xf32>
    %266 = arith.addf %265, %264 : vector<2x32xf32>
    %267 = arith.divf %265, %266 : vector<2x32xf32>
    %268 = vector.extract_strided_slice %255 {offsets = [0, 64], sizes = [2, 32], strides = [1, 1]} : vector<2x128xf32> to vector<2x32xf32>
    %269 = math.tanh %268 : vector<2x32xf32>
    %270 = vector.extract_strided_slice %255 {offsets = [0, 96], sizes = [2, 32], strides = [1, 1]} : vector<2x128xf32> to vector<2x32xf32>
    %271 = arith.negf %270 : vector<2x32xf32>
    %272 = math.exp %271 : vector<2x32xf32>
    %cst_81 = arith.constant 1.000000e+00 : f32
    %273 = vector.broadcast %cst_81 : f32 to vector<2x32xf32>
    %274 = arith.addf %273, %272 : vector<2x32xf32>
    %275 = arith.divf %273, %274 : vector<2x32xf32>
    %276 = arith.mulf %267, %243 : vector<2x32xf32>
    %277 = arith.mulf %261, %269 : vector<2x32xf32>
    %278 = arith.addf %276, %277 : vector<2x32xf32>
    %279 = math.tanh %278 : vector<2x32xf32>
    %280 = arith.mulf %275, %279 : vector<2x32xf32>
    %281 = arith.index_cast %c7_i32 : i32 to index
    %c0_82 = arith.constant 0 : index
    %c0_83 = arith.constant 0 : index
    %282 = vector.load %arg4[%281, %c0_82, %c0_83] : memref<8x2x32xf32, #tpu.memory_space<vmem>>, vector<1x2x32xf32>
    %283 = vector.shape_cast %282 : vector<1x2x32xf32> to vector<2x32xf32>
    %284 = vector.shape_cast %280 : vector<2x32xf32> to vector<1x2x32xf32>
    tpu.vector_store %arg4[%281, %c0_82, %c0_83], %284 {strides = array<i32>} : memref<8x2x32xf32, #tpu.memory_space<vmem>>, vector<1x2x32xf32>,
    %c8_i32 = arith.constant 8 : i32
    %c0_84 = arith.constant 0 : index
    %c0_85 = arith.constant 0 : index
    %285 = vector.load %arg7[%c0_84, %c0_85] : memref<2x32xf32, #tpu.memory_space<vmem>>, vector<2x32xf32>
    tpu.vector_store %arg7[%c0_84, %c0_85], %280 {strides = array<i32>} : memref<2x32xf32, #tpu.memory_space<vmem>>, vector<2x32xf32>,
    %c0_86 = arith.constant 0 : index
    %c0_87 = arith.constant 0 : index
    %286 = vector.load %arg8[%c0_86, %c0_87] : memref<2x32xf32, #tpu.memory_space<vmem>>, vector<2x32xf32>
    tpu.vector_store %arg8[%c0_86, %c0_87], %278 {strides = array<i32>} : memref<2x32xf32, #tpu.memory_space<vmem>>, vector<2x32xf32>,
    %c0_i32_88 = arith.constant 0 : i32
    %287 = arith.cmpi eq, %arg1, %c0_i32_88 : i32
    %288 = arith.extui %287 : i1 to i32
    %c0_i32_89 = arith.constant 0 : i32
    %289 = arith.cmpi ne, %288, %c0_i32_89 : i32
    scf.if %289 {
      %c0_90 = arith.constant 0 : index
      %c0_91 = arith.constant 0 : index
      %290 = vector.load %arg5[%c0_90, %c0_91] : memref<2x32xf32, #tpu.memory_space<vmem>>, vector<2x32xf32>
      tpu.vector_store %arg5[%c0_90, %c0_91], %280 {strides = array<i32>} : memref<2x32xf32, #tpu.memory_space<vmem>>, vector<2x32xf32>,
      %c0_92 = arith.constant 0 : index
      %c0_93 = arith.constant 0 : index
      %291 = vector.load %arg6[%c0_92, %c0_93] : memref<2x32xf32, #tpu.memory_space<vmem>>, vector<2x32xf32>
      tpu.vector_store %arg6[%c0_92, %c0_93], %278 {strides = array<i32>} : memref<2x32xf32, #tpu.memory_space<vmem>>, vector<2x32xf32>,
    } else {
    }
    return
  }
  func.func @transform_0(%arg0: i32, %arg1: i32) -> (i32, i32, i32) {
    %c0_i32 = arith.constant 0 : i32
    %c0_i32_0 = arith.constant 0 : i32
    return %arg1, %arg0, %c0_i32 : i32, i32, i32
  }
  func.func @transform_1(%arg0: i32, %arg1: i32) -> (i32, i32) {
    %c0_i32 = arith.constant 0 : i32
    %c0_i32_0 = arith.constant 0 : i32
    %c0_i32_1 = arith.constant 0 : i32
    return %c0_i32, %c0_i32_0 : i32, i32
  }
  func.func @transform_2(%arg0: i32, %arg1: i32) -> (i32, i32, i32) {
    %c0_i32 = arith.constant 0 : i32
    %c0_i32_0 = arith.constant 0 : i32
    return %arg1, %arg0, %c0_i32 : i32, i32, i32
  }
  func.func @transform_3(%arg0: i32, %arg1: i32) -> (i32, i32) {
    %c0_i32 = arith.constant 0 : i32
    %c0_i32_0 = arith.constant 0 : i32
    return %arg0, %c0_i32 : i32, i32
  }
  func.func @transform_4(%arg0: i32, %arg1: i32) -> (i32, i32) {
    %c0_i32 = arith.constant 0 : i32
    %c0_i32_0 = arith.constant 0 : i32
    return %arg0, %c0_i32 : i32, i32
  }
}

</mosaic_0001>

<llo_original>
// kernel: tpu_custom_call.1
$region0: #{tpu_custom_call.1}
  #allocation0 [shape = 'u32[]', space=smem, size = 0x4, offset = 0x4, fixed_abs, tag = 'smem constant byte address 0x4 - core index']
  #allocation1 [shape = 'u32[144,128]{1,0:T(1,128)}', space=vmem, size = 0x12000, scoped, tag = 'internal scratch']
  #allocation2 [shape = 'f32[2,32]{1,0:T(2,128)}', space=vmem, size = 0x400, scoped, tag = 'scratch operand']
  #allocation3 [shape = 'f32[2,32]{1,0:T(2,128)}', space=vmem, size = 0x400, scoped, tag = 'scratch operand']
  %s0 = inlined_call_operand.hbm [shape: f32[8,2,128], index: 0, kind: input, shape index: {}]
  %s1 = inlined_call_operand.hbm [shape: f32[32,128], index: 1, kind: input, shape index: {}]
  %s2 = inlined_call_operand.hbm [shape: f32[8,2,32], index: 2, kind: output, shape index: {0}]
  %s3 = inlined_call_operand.hbm [shape: f32[2,32], index: 3, kind: output, shape index: {1}]
  %s4 = inlined_call_operand.hbm [shape: f32[2,32], index: 4, kind: output, shape index: {2}]
  %5 = xla_tuple %s2, %s3, %s4
  %s6 = sld [smem:[#allocation0]]
  $region50: #{tpu_custom_call.1} parent=0
    _
  %s8 = ssub.s32 1, %s6
  %s9 = scalar_select 0, %s8, %s6
  $region1: #{tpu_custom_call.1} parent=0
    #allocation4 [shape = 'u8[8192]{0}', space=vmem, size = 0x2000, scoped, tag = 'input window, operand 0, single buffered']
    #allocation5 [shape = 's32[1]{0}', space=sflag, size = 0x4, scoped, tag = 'scoped memory for tpu_custom_call.1']
    #allocation6 [shape = 's32[1]{0}', space=sflag, size = 0x4, scoped, tag = 'scoped memory for tpu_custom_call.1']
    #allocation7 [shape = 'u8[16384]{0}', space=vmem, size = 0x4000, scoped, tag = 'input window, operand 1, single buffered']
    #allocation8 [shape = 's32[1]{0}', space=sflag, size = 0x4, scoped, tag = 'scoped memory for tpu_custom_call.1']
    #allocation9 [shape = 'u8[8192]{0}', space=vmem, size = 0x2000, scoped, tag = 'output window, operand 0, single buffered']
    #allocation10 [shape = 'u8[1024]{0}', space=vmem, size = 0x400, scoped, tag = 'output window, operand 1, single buffered']
    #allocation11 [shape = 's32[1]{0}', space=sflag, size = 0x4, scoped, tag = 'scoped memory for tpu_custom_call.1']
    #allocation12 [shape = 'u8[1024]{0}', space=vmem, size = 0x400, scoped, tag = 'output window, operand 2, single buffered']
    %10 = vsyncpa [#allocation5], 0
    %11 = vsyncpa [#allocation8], 0
    %12 = vsyncpa [#allocation6], 0
    %13 = vsyncpa [#allocation11], 0
    // Predicated region
    $region2: #{tpu_custom_call.1} parent=1 // pred_check
      _
    $region3: #{tpu_custom_call.1} parent=1 // pred_check_branch
      %15 = sbr.rel (0) target = $region5
    $region4: #{tpu_custom_call.1} parent=1 // pred_region
      %s17 = ssub.s32 256, 256
      %18 = vsyncadd [#allocation5], %s17
      %s19 = sshll.u32 [#allocation4], 4
      %s20 = int_to_ptr.vmem [resolvable:$true] %s19
      %25 = dma.hbm_to_vmem [thread:$0]  %s0, 256, %s20, [#allocation5], 32, 32, 2
    $region5: #{tpu_custom_call.1} parent=1 // pred_fallthru
      _
    // Predicated region
    $region6: #{tpu_custom_call.1} parent=1 // pred_check
      _
    $region7: #{tpu_custom_call.1} parent=1 // pred_check_branch
      %27 = sbr.rel (0) target = $region9
    $region8: #{tpu_custom_call.1} parent=1 // pred_region
      %s29 = ssub.s32 512, 512
      %30 = vsyncadd [#allocation8], %s29
      %s31 = sshll.u32 [#allocation7], 4
      %s32 = int_to_ptr.vmem [resolvable:$true] %s31
      %37 = dma.hbm_to_vmem [thread:$0]  %s1, 512, %s32, [#allocation8], 128, 128, 8
    $region9: #{tpu_custom_call.1} parent=1 // pred_fallthru
      _
    // Predicated region
    $region10: #{tpu_custom_call.1} parent=1 // pred_check
      _
    $region11: #{tpu_custom_call.1} parent=1 // pred_check_branch
      %39 = sbr.rel (0) target = $region13
    $region12: #{tpu_custom_call.1} parent=1 // pred_region
      %40 = dma.done [#allocation5], 256
    $region13: #{tpu_custom_call.1} parent=1 // pred_fallthru
      _
    // Predicated region
    $region14: #{tpu_custom_call.1} parent=1 // pred_check
      _
    $region15: #{tpu_custom_call.1} parent=1 // pred_check_branch
      %42 = sbr.rel (0) target = $region17
    $region16: #{tpu_custom_call.1} parent=1 // pred_region
      %43 = dma.done [#allocation8], 512
    $region17: #{tpu_custom_call.1} parent=1 // pred_fallthru
      _
    %p44 = scmp.eq.s32.totalorder 0, 0
    // Predicated region
    $region18: #{tpu_custom_call.1} parent=1 // pred_check
      %p45 = pneg %p44
    $region19: #{tpu_custom_call.1} parent=1 // pred_check_branch
      %47 = sbr.rel (%p45) target = $region21
    $region20: #{tpu_custom_call.1} parent=1 // pred_region
      %vm48 = vcmask 254976
      %49 = vst.msk [vmem:[#allocation2] sm:$0x3] %vm48, 0.0
      %50 = vst.msk [vmem:[#allocation3] sm:$0x3] %vm48, 0.0
    $region21: #{tpu_custom_call.1} parent=1 // pred_fallthru
      _
    %v51 = vld [vmem:[#allocation2] sm:$0x3]
    %v52 = vld [vmem:[#allocation3] sm:$0x3]
    %v53 = vld [vmem:[#allocation4] sm:$0x3]
    %v54 = vld [vmem:[#allocation7] sm:$0xff]
    %v55 = vld [vmem:[#allocation7 + $0x8] sm:$0xff]
    %v56 = vld [vmem:[#allocation7 + $0x10] sm:$0xff]
    %v57 = vld [vmem:[#allocation7 + $0x18] sm:$0xff]
    %vm58 = vcmask 261120
    %v60 = vsel %vm58, %v51, 0
    %62 = vmatprep.subr.mxu0 0.0
    %63 = vmatpush1.msra.mxu0 %v54
    %64 = vmatprep.subr.mxu0 0.0
    %65 = vmatpush1.msra.mxu0 %v55
    %66 = vmatprep.subr.mxu0 0.0
    %67 = vmatpush1.msra.mxu0 %v56
    %68 = vmatprep.subr.mxu0 0.0
    %69 = vmatpush1.msra.mxu0 %v57
    %70 = vmatprep.subr.mxu0 0.0
    %71 = vmatpush1.msra.mxu0 0.0
    %72 = vmatprep.subr.mxu0 0.0
    %73 = vmatpush1.msra.mxu0 0.0
    %74 = vmatprep.subr.mxu0 0.0
    %75 = vmatpush1.msra.mxu0 0.0
    %76 = vmatprep.subr.mxu0 0.0
    %77 = vmatpush1.msra.mxu0 0.0
    %78 = vmatprep.subr.mxu0 0.0
    %79 = vmatpush1.msra.mxu0 0.0
    %80 = vmatprep.subr.mxu0 0.0
    %81 = vmatpush1.msra.mxu0 0.0
    %82 = vmatprep.subr.mxu0 0.0
    %83 = vmatpush1.msra.mxu0 0.0
    %84 = vmatprep.subr.mxu0 0.0
    %85 = vmatpush1.msra.mxu0 0.0
    %86 = vmatprep.subr.mxu0 0.0
    %87 = vmatpush1.msra.mxu0 0.0
    %88 = vmatprep.subr.mxu0 0.0
    %89 = vmatpush1.msra.mxu0 0.0
    %90 = vmatprep.subr.mxu0 0.0
    %91 = vmatpush1.msra.mxu0 0.0
    %92 = vmatprep.subr.mxu0 0.0
    %93 = vmatpush1.msra.mxu0 0.0
    %94 = vmatprep.subr.mxu0 0.0
    %95 = vmatpush1.msra.mxu0 0.0
    %96 = vmatprep.subr.mxu0 0.0
    %97 = vmatpush1.msra.mxu0 0.0
    %98 = vmatprep.subr.mxu0 0.0
    %99 = vmatpush1.msra.mxu0 0.0
    %100 = vmatprep.subr.mxu0 0.0
    %101 = vmatpush1.msra.mxu0 0.0
    %102 = vmatprep.subr.mxu0 0.0
    %103 = vmatpush1.msra.mxu0 0.0
    %104 = vmatprep.subr.mxu0 0.0
    %105 = vmatpush1.msra.mxu0 0.0
    %106 = vmatprep.subr.mxu0 0.0
    %107 = vmatpush1.msra.mxu0 0.0
    %108 = vmatprep.subr.mxu0 0.0
    %109 = vmatpush1.msra.mxu0 0.0
    %110 = vmatprep.subr.mxu0 0.0
    %111 = vmatpush1.msra.mxu0 0.0
    %112 = vmatprep.subr.mxu0 0.0
    %113 = vmatpush1.msra.mxu0 0.0
    %114 = vmatprep.subr.mxu0 0.0
    %115 = vmatpush1.msra.mxu0 0.0
    %116 = vmatprep.subr.mxu0 0.0
    %117 = vmatpush1.msra.mxu0 0.0
    %118 = vmatprep.subr.mxu0 0.0
    %119 = vmatpush1.msra.mxu0 0.0
    %120 = vmatprep.subr.mxu0 0.0
    %121 = vmatpush1.msra.mxu0 0.0
    %122 = vmatprep.subr.mxu0 0.0
    %123 = vmatpush1.msra.mxu0 0.0
    %124 = vmatprep.subr.mxu0 0.0
    %125 = vmatpush1.msra.mxu0 0.0
    %126 = vmatprep.mubr.f32.mxu0 0.0
    %127 = vmatmul.mubr.f32.gmra.mrb[0].mxu0 %v60
    %v128 = vpop.f32.mrb[0].mxu0
    %v129 = vadd.f32 0.0, %v128
    %v130 = vpop.f32.mrb[0].mxu0
    %131 = vdwg.mxu0
    %v132 = vadd.f32 %v53, %v129
    %v133 = vxor.u32 %v132, 2147483648
    %v134 = vmul.f32 %v133, 1.442695
    %v135 = vpow.pop %v134
    %v136 = vadd.f32 %v135, 1.0
    %v137 = vrcp.pop %v136
    %v138 = vmul.f32 1.0, %v137
    %v139 = vtanh.pop %v132
    %141 = vrot.lane.b32.xlu0 %v52, 32
    %v142 = vpop.permute.xlu0 %141
    %v144 = vmul.f32 %v138, %v142
    %146 = vrot.lane.b32.xlu0 %v139, 64
    %v147 = vpop.permute.xlu0 %146
    %v149 = vmul.f32 %v138, %v147
    %151 = vrot.lane.b32.xlu0 %v149, 32
    %v152 = vpop.permute.xlu0 %151
    %v154 = vadd.f32 %v144, %v152
    %v155 = vtanh.pop %v154
    %157 = vrot.lane.b32.xlu0 %v155, 64
    %v158 = vpop.permute.xlu0 %157
    %v160 = vmul.f32 %v138, %v158
    %162 = vrot.lane.b32.xlu0 %v160, 32
    %v163 = vpop.permute.xlu0 %162
    %vm165 = vcmask 254976
    %166 = vst.msk [vmem:[#allocation9] sm:$0x3] %vm165, %v163
    %s167 = scalar_lea.vmem [#allocation4], 2
    %v168 = vld [vmem:[%s167] sm:$0x3]
    %v169 = vld [vmem:[#allocation7] sm:$0xff]
    %v170 = vld [vmem:[#allocation7 + $0x8] sm:$0xff]
    %v171 = vld [vmem:[#allocation7 + $0x10] sm:$0xff]
    %v172 = vld [vmem:[#allocation7 + $0x18] sm:$0xff]
    %v173 = vsel %vm58, %v163, 0
    %175 = vmatprep.subr.mxu0 0.0
    %176 = vmatpush1.msra.mxu0 %v169
    %177 = vmatprep.subr.mxu0 0.0
    %178 = vmatpush1.msra.mxu0 %v170
    %179 = vmatprep.subr.mxu0 0.0
    %180 = vmatpush1.msra.mxu0 %v171
    %181 = vmatprep.subr.mxu0 0.0
    %182 = vmatpush1.msra.mxu0 %v172
    %183 = vmatprep.subr.mxu0 0.0
    %184 = vmatpush1.msra.mxu0 0.0
    %185 = vmatprep.subr.mxu0 0.0
    %186 = vmatpush1.msra.mxu0 0.0
    %187 = vmatprep.subr.mxu0 0.0
    %188 = vmatpush1.msra.mxu0 0.0
    %189 = vmatprep.subr.mxu0 0.0
    %190 = vmatpush1.msra.mxu0 0.0
    %191 = vmatprep.subr.mxu0 0.0
    %192 = vmatpush1.msra.mxu0 0.0
    %193 = vmatprep.subr.mxu0 0.0
    %194 = vmatpush1.msra.mxu0 0.0
    %195 = vmatprep.subr.mxu0 0.0
    %196 = vmatpush1.msra.mxu0 0.0
    %197 = vmatprep.subr.mxu0 0.0
    %198 = vmatpush1.msra.mxu0 0.0
    %199 = vmatprep.subr.mxu0 0.0
    %200 = vmatpush1.msra.mxu0 0.0
    %201 = vmatprep.subr.mxu0 0.0
    %202 = vmatpush1.msra.mxu0 0.0
    %203 = vmatprep.subr.mxu0 0.0
    %204 = vmatpush1.msra.mxu0 0.0
    %205 = vmatprep.subr.mxu0 0.0
    %206 = vmatpush1.msra.mxu0 0.0
    %207 = vmatprep.subr.mxu0 0.0
    %208 = vmatpush1.msra.mxu0 0.0
    %209 = vmatprep.subr.mxu0 0.0
    %210 = vmatpush1.msra.mxu0 0.0
    %211 = vmatprep.subr.mxu0 0.0
    %212 = vmatpush1.msra.mxu0 0.0
    %213 = vmatprep.subr.mxu0 0.0
    %214 = vmatpush1.msra.mxu0 0.0
    %215 = vmatprep.subr.mxu0 0.0
    %216 = vmatpush1.msra.mxu0 0.0
    %217 = vmatprep.subr.mxu0 0.0
    %218 = vmatpush1.msra.mxu0 0.0
    %219 = vmatprep.subr.mxu0 0.0
    %220 = vmatpush1.msra.mxu0 0.0
    %221 = vmatprep.subr.mxu0 0.0
    %222 = vmatpush1.msra.mxu0 0.0
    %223 = vmatprep.subr.mxu0 0.0
    %224 = vmatpush1.msra.mxu0 0.0
    %225 = vmatprep.subr.mxu0 0.0
    %226 = vmatpush1.msra.mxu0 0.0
    %227 = vmatprep.subr.mxu0 0.0
    %228 = vmatpush1.msra.mxu0 0.0
    %229 = vmatprep.subr.mxu0 0.0
    %230 = vmatpush1.msra.mxu0 0.0
    %231 = vmatprep.subr.mxu0 0.0
    %232 = vmatpush1.msra.mxu0 0.0
    %233 = vmatprep.subr.mxu0 0.0
    %234 = vmatpush1.msra.mxu0 0.0
    %235 = vmatprep.subr.mxu0 0.0
    %236 = vmatpush1.msra.mxu0 0.0
    %237 = vmatprep.subr.mxu0 0.0
    %238 = vmatpush1.msra.mxu0 0.0
    %239 = vmatprep.mubr.f32.mxu0 0.0
    %240 = vmatmul.mubr.f32.gmra.mrb[0].mxu0 %v173
    %v241 = vpop.f32.mrb[0].mxu0
    %v242 = vadd.f32 0.0, %v241
    %v243 = vpop.f32.mrb[0].mxu0
    %244 = vdwg.mxu0
    %v245 = vadd.f32 %v168, %v242
    %v246 = vxor.u32 %v245, 2147483648
    %v247 = vmul.f32 %v246, 1.442695
    %v248 = vpow.pop %v247
    %v249 = vadd.f32 %v248, 1.0
    %v250 = vrcp.pop %v249
    %v251 = vmul.f32 1.0, %v250
    %v252 = vtanh.pop %v245
    %v253 = vmul.f32 %v251, %v154
    %255 = vrot.lane.b32.xlu0 %v252, 64
    %v256 = vpop.permute.xlu0 %255
    %v258 = vmul.f32 %v251, %v256
    %260 = vrot.lane.b32.xlu0 %v258, 32
    %v261 = vpop.permute.xlu0 %260
    %v263 = vadd.f32 %v253, %v261
    %v264 = vtanh.pop %v263
    %266 = vrot.lane.b32.xlu0 %v264, 64
    %v267 = vpop.permute.xlu0 %266
    %v269 = vmul.f32 %v251, %v267
    %271 = vrot.lane.b32.xlu0 %v269, 32
    %v272 = vpop.permute.xlu0 %271
    %s274 = scalar_lea.vmem [#allocation9], 2
    %275 = vst.msk [vmem:[%s274] sm:$0x3] %vm165, %v272
    %s276 = scalar_lea.vmem [#allocation4], 4
    %v277 = vld [vmem:[%s276] sm:$0x3]
    %v278 = vld [vmem:[#allocation7] sm:$0xff]
    %v279 = vld [vmem:[#allocation7 + $0x8] sm:$0xff]
    %v280 = vld [vmem:[#allocation7 + $0x10] sm:$0xff]
    %v281 = vld [vmem:[#allocation7 + $0x18] sm:$0xff]
    %v282 = vsel %vm58, %v272, 0
    %284 = vmatprep.subr.mxu0 0.0
    %285 = vmatpush1.msra.mxu0 %v278
    %286 = vmatprep.subr.mxu0 0.0
    %287 = vmatpush1.msra.mxu0 %v279
    %288 = vmatprep.subr.mxu0 0.0
    %289 = vmatpush1.msra.mxu0 %v280
    %290 = vmatprep.subr.mxu0 0.0
    %291 = vmatpush1.msra.mxu0 %v281
    %292 = vmatprep.subr.mxu0 0.0
    %293 = vmatpush1.msra.mxu0 0.0
    %294 = vmatprep.subr.mxu0 0.0
    %295 = vmatpush1.msra.mxu0 0.0
    %296 = vmatprep.subr.mxu0 0.0
    %297 = vmatpush1.msra.mxu0 0.0
    %298 = vmatprep.subr.mxu0 0.0
    %299 = vmatpush1.msra.mxu0 0.0
    %300 = vmatprep.subr.mxu0 0.0
    %301 = vmatpush1.msra.mxu0 0.0
    %302 = vmatprep.subr.mxu0 0.0
    %303 = vmatpush1.msra.mxu0 0.0
    %304 = vmatprep.subr.mxu0 0.0
    %305 = vmatpush1.msra.mxu0 0.0
    %306 = vmatprep.subr.mxu0 0.0
    %307 = vmatpush1.msra.mxu0 0.0
    %308 = vmatprep.subr.mxu0 0.0
    %309 = vmatpush1.msra.mxu0 0.0
    %310 = vmatprep.subr.mxu0 0.0
    %311 = vmatpush1.msra.mxu0 0.0
    %312 = vmatprep.subr.mxu0 0.0
    %313 = vmatpush1.msra.mxu0 0.0
    %314 = vmatprep.subr.mxu0 0.0
    %315 = vmatpush1.msra.mxu0 0.0
    %316 = vmatprep.subr.mxu0 0.0
    %317 = vmatpush1.msra.mxu0 0.0
    %318 = vmatprep.subr.mxu0 0.0
    %319 = vmatpush1.msra.mxu0 0.0
    %320 = vmatprep.subr.mxu0 0.0
    %321 = vmatpush1.msra.mxu0 0.0
    %322 = vmatprep.subr.mxu0 0.0
    %323 = vmatpush1.msra.mxu0 0.0
    %324 = vmatprep.subr.mxu0 0.0
    %325 = vmatpush1.msra.mxu0 0.0
    %326 = vmatprep.subr.mxu0 0.0
    %327 = vmatpush1.msra.mxu0 0.0
    %328 = vmatprep.subr.mxu0 0.0
    %329 = vmatpush1.msra.mxu0 0.0
    %330 = vmatprep.subr.mxu0 0.0
    %331 = vmatpush1.msra.mxu0 0.0
    %332 = vmatprep.subr.mxu0 0.0
    %333 = vmatpush1.msra.mxu0 0.0
    %334 = vmatprep.subr.mxu0 0.0
    %335 = vmatpush1.msra.mxu0 0.0
    %336 = vmatprep.subr.mxu0 0.0
    %337 = vmatpush1.msra.mxu0 0.0
    %338 = vmatprep.subr.mxu0 0.0
    %339 = vmatpush1.msra.mxu0 0.0
    %340 = vmatprep.subr.mxu0 0.0
    %341 = vmatpush1.msra.mxu0 0.0
    %342 = vmatprep.subr.mxu0 0.0
    %343 = vmatpush1.msra.mxu0 0.0
    %344 = vmatprep.subr.mxu0 0.0
    %345 = vmatpush1.msra.mxu0 0.0
    %346 = vmatprep.subr.mxu0 0.0
    %347 = vmatpush1.msra.mxu0 0.0
    %348 = vmatprep.mubr.f32.mxu0 0.0
    %349 = vmatmul.mubr.f32.gmra.mrb[0].mxu0 %v282
    %v350 = vpop.f32.mrb[0].mxu0
    %v351 = vadd.f32 0.0, %v350
    %v352 = vpop.f32.mrb[0].mxu0
    %353 = vdwg.mxu0
    %v354 = vadd.f32 %v277, %v351
    %v355 = vxor.u32 %v354, 2147483648
    %v356 = vmul.f32 %v355, 1.442695
    %v357 = vpow.pop %v356
    %v358 = vadd.f32 %v357, 1.0
    %v359 = vrcp.pop %v358
    %v360 = vmul.f32 1.0, %v359
    %v361 = vtanh.pop %v354
    %v362 = vmul.f32 %v360, %v263
    %364 = vrot.lane.b32.xlu0 %v361, 64
    %v365 = vpop.permute.xlu0 %364
    %v367 = vmul.f32 %v360, %v365
    %369 = vrot.lane.b32.xlu0 %v367, 32
    %v370 = vpop.permute.xlu0 %369
    %v372 = vadd.f32 %v362, %v370
    %v373 = vtanh.pop %v372
    %375 = vrot.lane.b32.xlu0 %v373, 64
    %v376 = vpop.permute.xlu0 %375
    %v378 = vmul.f32 %v360, %v376
    %380 = vrot.lane.b32.xlu0 %v378, 32
    %v381 = vpop.permute.xlu0 %380
    %s383 = scalar_lea.vmem [#allocation9], 4
    %384 = vst.msk [vmem:[%s383] sm:$0x3] %vm165, %v381
    %s385 = scalar_lea.vmem [#allocation4], 6
    %v386 = vld [vmem:[%s385] sm:$0x3]
    %v387 = vld [vmem:[#allocation7] sm:$0xff]
    %v388 = vld [vmem:[#allocation7 + $0x8] sm:$0xff]
    %v389 = vld [vmem:[#allocation7 + $0x10] sm:$0xff]
    %v390 = vld [vmem:[#allocation7 + $0x18] sm:$0xff]
    %v391 = vsel %vm58, %v381, 0
    %393 = vmatprep.subr.mxu0 0.0
    %394 = vmatpush1.msra.mxu0 %v387
    %395 = vmatprep.subr.mxu0 0.0
    %396 = vmatpush1.msra.mxu0 %v388
    %397 = vmatprep.subr.mxu0 0.0
    %398 = vmatpush1.msra.mxu0 %v389
    %399 = vmatprep.subr.mxu0 0.0
    %400 = vmatpush1.msra.mxu0 %v390
    %401 = vmatprep.subr.mxu0 0.0
    %402 = vmatpush1.msra.mxu0 0.0
    %403 = vmatprep.subr.mxu0 0.0
    %404 = vmatpush1.msra.mxu0 0.0
    %405 = vmatprep.subr.mxu0 0.0
    %406 = vmatpush1.msra.mxu0 0.0
    %407 = vmatprep.subr.mxu0 0.0
    %408 = vmatpush1.msra.mxu0 0.0
    %409 = vmatprep.subr.mxu0 0.0
    %410 = vmatpush1.msra.mxu0 0.0
    %411 = vmatprep.subr.mxu0 0.0
    %412 = vmatpush1.msra.mxu0 0.0
    %413 = vmatprep.subr.mxu0 0.0
    %414 = vmatpush1.msra.mxu0 0.0
    %415 = vmatprep.subr.mxu0 0.0
    %416 = vmatpush1.msra.mxu0 0.0
    %417 = vmatprep.subr.mxu0 0.0
    %418 = vmatpush1.msra.mxu0 0.0
    %419 = vmatprep.subr.mxu0 0.0
    %420 = vmatpush1.msra.mxu0 0.0
    %421 = vmatprep.subr.mxu0 0.0
    %422 = vmatpush1.msra.mxu0 0.0
    %423 = vmatprep.subr.mxu0 0.0
    %424 = vmatpush1.msra.mxu0 0.0
    %425 = vmatprep.subr.mxu0 0.0
    %426 = vmatpush1.msra.mxu0 0.0
    %427 = vmatprep.subr.mxu0 0.0
    %428 = vmatpush1.msra.mxu0 0.0
    %429 = vmatprep.subr.mxu0 0.0
    %430 = vmatpush1.msra.mxu0 0.0
    %431 = vmatprep.subr.mxu0 0.0
    %432 = vmatpush1.msra.mxu0 0.0
    %433 = vmatprep.subr.mxu0 0.0
    %434 = vmatpush1.msra.mxu0 0.0
    %435 = vmatprep.subr.mxu0 0.0
    %436 = vmatpush1.msra.mxu0 0.0
    %437 = vmatprep.subr.mxu0 0.0
    %438 = vmatpush1.msra.mxu0 0.0
    %439 = vmatprep.subr.mxu0 0.0
    %440 = vmatpush1.msra.mxu0 0.0
    %441 = vmatprep.subr.mxu0 0.0
    %442 = vmatpush1.msra.mxu0 0.0
    %443 = vmatprep.subr.mxu0 0.0
    %444 = vmatpush1.msra.mxu0 0.0
    %445 = vmatprep.subr.mxu0 0.0
    %446 = vmatpush1.msra.mxu0 0.0
    %447 = vmatprep.subr.mxu0 0.0
    %448 = vmatpush1.msra.mxu0 0.0
    %449 = vmatprep.subr.mxu0 0.0
    %450 = vmatpush1.msra.mxu0 0.0
    %451 = vmatprep.subr.mxu0 0.0
    %452 = vmatpush1.msra.mxu0 0.0
    %453 = vmatprep.subr.mxu0 0.0
    %454 = vmatpush1.msra.mxu0 0.0
    %455 = vmatprep.subr.mxu0 0.0
    %456 = vmatpush1.msra.mxu0 0.0
    %457 = vmatprep.mubr.f32.mxu0 0.0
    %458 = vmatmul.mubr.f32.gmra.mrb[0].mxu0 %v391
    %v459 = vpop.f32.mrb[0].mxu0
    %v460 = vadd.f32 0.0, %v459
    %v461 = vpop.f32.mrb[0].mxu0
    %462 = vdwg.mxu0
    %v463 = vadd.f32 %v386, %v460
    %v464 = vxor.u32 %v463, 2147483648
    %v465 = vmul.f32 %v464, 1.442695
    %v466 = vpow.pop %v465
    %v467 = vadd.f32 %v466, 1.0
    %v468 = vrcp.pop %v467
    %v469 = vmul.f32 1.0, %v468
    %v470 = vtanh.pop %v463
    %v471 = vmul.f32 %v469, %v372
    %473 = vrot.lane.b32.xlu0 %v470, 64
    %v474 = vpop.permute.xlu0 %473
    %v476 = vmul.f32 %v469, %v474
    %478 = vrot.lane.b32.xlu0 %v476, 32
    %v479 = vpop.permute.xlu0 %478
    %v481 = vadd.f32 %v471, %v479
    %v482 = vtanh.pop %v481
    %484 = vrot.lane.b32.xlu0 %v482, 64
    %v485 = vpop.permute.xlu0 %484
    %v487 = vmul.f32 %v469, %v485
    %489 = vrot.lane.b32.xlu0 %v487, 32
    %v490 = vpop.permute.xlu0 %489
    %s492 = scalar_lea.vmem [#allocation9], 6
    %493 = vst.msk [vmem:[%s492] sm:$0x3] %vm165, %v490
    %s494 = scalar_lea.vmem [#allocation4], 8
    %v495 = vld [vmem:[%s494] sm:$0x3]
    %v496 = vld [vmem:[#allocation7] sm:$0xff]
    %v497 = vld [vmem:[#allocation7 + $0x8] sm:$0xff]
    %v498 = vld [vmem:[#allocation7 + $0x10] sm:$0xff]
    %v499 = vld [vmem:[#allocation7 + $0x18] sm:$0xff]
    %v500 = vsel %vm58, %v490, 0
    %502 = vmatprep.subr.mxu0 0.0
    %503 = vmatpush1.msra.mxu0 %v496
    %504 = vmatprep.subr.mxu0 0.0
    %505 = vmatpush1.msra.mxu0 %v497
    %506 = vmatprep.subr.mxu0 0.0
    %507 = vmatpush1.msra.mxu0 %v498
    %508 = vmatprep.subr.mxu0 0.0
    %509 = vmatpush1.msra.mxu0 %v499
    %510 = vmatprep.subr.mxu0 0.0
    %511 = vmatpush1.msra.mxu0 0.0
    %512 = vmatprep.subr.mxu0 0.0
    %513 = vmatpush1.msra.mxu0 0.0
    %514 = vmatprep.subr.mxu0 0.0
    %515 = vmatpush1.msra.mxu0 0.0
    %516 = vmatprep.subr.mxu0 0.0
    %517 = vmatpush1.msra.mxu0 0.0
    %518 = vmatprep.subr.mxu0 0.0
    %519 = vmatpush1.msra.mxu0 0.0
    %520 = vmatprep.subr.mxu0 0.0
    %521 = vmatpush1.msra.mxu0 0.0
    %522 = vmatprep.subr.mxu0 0.0
    %523 = vmatpush1.msra.mxu0 0.0
    %524 = vmatprep.subr.mxu0 0.0
    %525 = vmatpush1.msra.mxu0 0.0
    %526 = vmatprep.subr.mxu0 0.0
    %527 = vmatpush1.msra.mxu0 0.0
    %528 = vmatprep.subr.mxu0 0.0
    %529 = vmatpush1.msra.mxu0 0.0
    %530 = vmatprep.subr.mxu0 0.0
    %531 = vmatpush1.msra.mxu0 0.0
    %532 = vmatprep.subr.mxu0 0.0
    %533 = vmatpush1.msra.mxu0 0.0
    %534 = vmatprep.subr.mxu0 0.0
    %535 = vmatpush1.msra.mxu0 0.0
    %536 = vmatprep.subr.mxu0 0.0
    %537 = vmatpush1.msra.mxu0 0.0
    %538 = vmatprep.subr.mxu0 0.0
    %539 = vmatpush1.msra.mxu0 0.0
    %540 = vmatprep.subr.mxu0 0.0
    %541 = vmatpush1.msra.mxu0 0.0
    %542 = vmatprep.subr.mxu0 0.0
    %543 = vmatpush1.msra.mxu0 0.0
    %544 = vmatprep.subr.mxu0 0.0
    %545 = vmatpush1.msra.mxu0 0.0
    %546 = vmatprep.subr.mxu0 0.0
    %547 = vmatpush1.msra.mxu0 0.0
    %548 = vmatprep.subr.mxu0 0.0
    %549 = vmatpush1.msra.mxu0 0.0
    %550 = vmatprep.subr.mxu0 0.0
    %551 = vmatpush1.msra.mxu0 0.0
    %552 = vmatprep.subr.mxu0 0.0
    %553 = vmatpush1.msra.mxu0 0.0
    %554 = vmatprep.subr.mxu0 0.0
    %555 = vmatpush1.msra.mxu0 0.0
    %556 = vmatprep.subr.mxu0 0.0
    %557 = vmatpush1.msra.mxu0 0.0
    %558 = vmatprep.subr.mxu0 0.0
    %559 = vmatpush1.msra.mxu0 0.0
    %560 = vmatprep.subr.mxu0 0.0
    %561 = vmatpush1.msra.mxu0 0.0
    %562 = vmatprep.subr.mxu0 0.0
    %563 = vmatpush1.msra.mxu0 0.0
    %564 = vmatprep.subr.mxu0 0.0
    %565 = vmatpush1.msra.mxu0 0.0
    %566 = vmatprep.mubr.f32.mxu0 0.0
    %567 = vmatmul.mubr.f32.gmra.mrb[0].mxu0 %v500
    %v568 = vpop.f32.mrb[0].mxu0
    %v569 = vadd.f32 0.0, %v568
    %v570 = vpop.f32.mrb[0].mxu0
    %571 = vdwg.mxu0
    %v572 = vadd.f32 %v495, %v569
    %v573 = vxor.u32 %v572, 2147483648
    %v574 = vmul.f32 %v573, 1.442695
    %v575 = vpow.pop %v574
    %v576 = vadd.f32 %v575, 1.0
    %v577 = vrcp.pop %v576
    %v578 = vmul.f32 1.0, %v577
    %v579 = vtanh.pop %v572
    %v580 = vmul.f32 %v578, %v481
    %582 = vrot.lane.b32.xlu0 %v579, 64
    %v583 = vpop.permute.xlu0 %582
    %v585 = vmul.f32 %v578, %v583
    %587 = vrot.lane.b32.xlu0 %v585, 32
    %v588 = vpop.permute.xlu0 %587
    %v590 = vadd.f32 %v580, %v588
    %v591 = vtanh.pop %v590
    %593 = vrot.lane.b32.xlu0 %v591, 64
    %v594 = vpop.permute.xlu0 %593
    %v596 = vmul.f32 %v578, %v594
    %598 = vrot.lane.b32.xlu0 %v596, 32
    %v599 = vpop.permute.xlu0 %598
    %s601 = scalar_lea.vmem [#allocation9], 8
    %602 = vst.msk [vmem:[%s601] sm:$0x3] %vm165, %v599
    %s603 = scalar_lea.vmem [#allocation4], 10
    %v604 = vld [vmem:[%s603] sm:$0x3]
    %v605 = vld [vmem:[#allocation7] sm:$0xff]
    %v606 = vld [vmem:[#allocation7 + $0x8] sm:$0xff]
    %v607 = vld [vmem:[#allocation7 + $0x10] sm:$0xff]
    %v608 = vld [vmem:[#allocation7 + $0x18] sm:$0xff]
    %v609 = vsel %vm58, %v599, 0
    %611 = vmatprep.subr.mxu0 0.0
    %612 = vmatpush1.msra.mxu0 %v605
    %613 = vmatprep.subr.mxu0 0.0
    %614 = vmatpush1.msra.mxu0 %v606
    %615 = vmatprep.subr.mxu0 0.0
    %616 = vmatpush1.msra.mxu0 %v607
    %617 = vmatprep.subr.mxu0 0.0
    %618 = vmatpush1.msra.mxu0 %v608
    %619 = vmatprep.subr.mxu0 0.0
    %620 = vmatpush1.msra.mxu0 0.0
    %621 = vmatprep.subr.mxu0 0.0
    %622 = vmatpush1.msra.mxu0 0.0
    %623 = vmatprep.subr.mxu0 0.0
    %624 = vmatpush1.msra.mxu0 0.0
    %625 = vmatprep.subr.mxu0 0.0
    %626 = vmatpush1.msra.mxu0 0.0
    %627 = vmatprep.subr.mxu0 0.0
    %628 = vmatpush1.msra.mxu0 0.0
    %629 = vmatprep.subr.mxu0 0.0
    %630 = vmatpush1.msra.mxu0 0.0
    %631 = vmatprep.subr.mxu0 0.0
    %632 = vmatpush1.msra.mxu0 0.0
    %633 = vmatprep.subr.mxu0 0.0
    %634 = vmatpush1.msra.mxu0 0.0
    %635 = vmatprep.subr.mxu0 0.0
    %636 = vmatpush1.msra.mxu0 0.0
    %637 = vmatprep.subr.mxu0 0.0
    %638 = vmatpush1.msra.mxu0 0.0
    %639 = vmatprep.subr.mxu0 0.0
    %640 = vmatpush1.msra.mxu0 0.0
    %641 = vmatprep.subr.mxu0 0.0
    %642 = vmatpush1.msra.mxu0 0.0
    %643 = vmatprep.subr.mxu0 0.0
    %644 = vmatpush1.msra.mxu0 0.0
    %645 = vmatprep.subr.mxu0 0.0
    %646 = vmatpush1.msra.mxu0 0.0
    %647 = vmatprep.subr.mxu0 0.0
    %648 = vmatpush1.msra.mxu0 0.0
    %649 = vmatprep.subr.mxu0 0.0
    %650 = vmatpush1.msra.mxu0 0.0
    %651 = vmatprep.subr.mxu0 0.0
    %652 = vmatpush1.msra.mxu0 0.0
    %653 = vmatprep.subr.mxu0 0.0
    %654 = vmatpush1.msra.mxu0 0.0
    %655 = vmatprep.subr.mxu0 0.0
    %656 = vmatpush1.msra.mxu0 0.0
    %657 = vmatprep.subr.mxu0 0.0
    %658 = vmatpush1.msra.mxu0 0.0
    %659 = vmatprep.subr.mxu0 0.0
    %660 = vmatpush1.msra.mxu0 0.0
    %661 = vmatprep.subr.mxu0 0.0
    %662 = vmatpush1.msra.mxu0 0.0
    %663 = vmatprep.subr.mxu0 0.0
    %664 = vmatpush1.msra.mxu0 0.0
    %665 = vmatprep.subr.mxu0 0.0
    %666 = vmatpush1.msra.mxu0 0.0
    %667 = vmatprep.subr.mxu0 0.0
    %668 = vmatpush1.msra.mxu0 0.0
    %669 = vmatprep.subr.mxu0 0.0
    %670 = vmatpush1.msra.mxu0 0.0
    %671 = vmatprep.subr.mxu0 0.0
    %672 = vmatpush1.msra.mxu0 0.0
    %673 = vmatprep.subr.mxu0 0.0
    %674 = vmatpush1.msra.mxu0 0.0
    %675 = vmatprep.mubr.f32.mxu0 0.0
    %676 = vmatmul.mubr.f32.gmra.mrb[0].mxu0 %v609
    %v677 = vpop.f32.mrb[0].mxu0
    %v678 = vadd.f32 0.0, %v677
    %v679 = vpop.f32.mrb[0].mxu0
    %680 = vdwg.mxu0
    %v681 = vadd.f32 %v604, %v678
    %v682 = vxor.u32 %v681, 2147483648
    %v683 = vmul.f32 %v682, 1.442695
    %v684 = vpow.pop %v683
    %v685 = vadd.f32 %v684, 1.0
    %v686 = vrcp.pop %v685
    %v687 = vmul.f32 1.0, %v686
    %v688 = vtanh.pop %v681
    %v689 = vmul.f32 %v687, %v590
    %691 = vrot.lane.b32.xlu0 %v688, 64
    %v692 = vpop.permute.xlu0 %691
    %v694 = vmul.f32 %v687, %v692
    %696 = vrot.lane.b32.xlu0 %v694, 32
    %v697 = vpop.permute.xlu0 %696
    %v699 = vadd.f32 %v689, %v697
    %v700 = vtanh.pop %v699
    %702 = vrot.lane.b32.xlu0 %v700, 64
    %v703 = vpop.permute.xlu0 %702
    %v705 = vmul.f32 %v687, %v703
    %707 = vrot.lane.b32.xlu0 %v705, 32
    %v708 = vpop.permute.xlu0 %707
    %s710 = scalar_lea.vmem [#allocation9], 10
    %711 = vst.msk [vmem:[%s710] sm:$0x3] %vm165, %v708
    %s712 = scalar_lea.vmem [#allocation4], 12
    %v713 = vld [vmem:[%s712] sm:$0x3]
    %v714 = vld [vmem:[#allocation7] sm:$0xff]
    %v715 = vld [vmem:[#allocation7 + $0x8] sm:$0xff]
    %v716 = vld [vmem:[#allocation7 + $0x10] sm:$0xff]
    %v717 = vld [vmem:[#allocation7 + $0x18] sm:$0xff]
    %v718 = vsel %vm58, %v708, 0
    %720 = vmatprep.subr.mxu0 0.0
    %721 = vmatpush1.msra.mxu0 %v714
    %722 = vmatprep.subr.mxu0 0.0
    %723 = vmatpush1.msra.mxu0 %v715
    %724 = vmatprep.subr.mxu0 0.0
    %725 = vmatpush1.msra.mxu0 %v716
    %726 = vmatprep.subr.mxu0 0.0
    %727 = vmatpush1.msra.mxu0 %v717
    %728 = vmatprep.subr.mxu0 0.0
    %729 = vmatpush1.msra.mxu0 0.0
    %730 = vmatprep.subr.mxu0 0.0
    %731 = vmatpush1.msra.mxu0 0.0
    %732 = vmatprep.subr.mxu0 0.0
    %733 = vmatpush1.msra.mxu0 0.0
    %734 = vmatprep.subr.mxu0 0.0
    %735 = vmatpush1.msra.mxu0 0.0
    %736 = vmatprep.subr.mxu0 0.0
    %737 = vmatpush1.msra.mxu0 0.0
    %738 = vmatprep.subr.mxu0 0.0
    %739 = vmatpush1.msra.mxu0 0.0
    %740 = vmatprep.subr.mxu0 0.0
    %741 = vmatpush1.msra.mxu0 0.0
    %742 = vmatprep.subr.mxu0 0.0
    %743 = vmatpush1.msra.mxu0 0.0
    %744 = vmatprep.subr.mxu0 0.0
    %745 = vmatpush1.msra.mxu0 0.0
    %746 = vmatprep.subr.mxu0 0.0
    %747 = vmatpush1.msra.mxu0 0.0
    %748 = vmatprep.subr.mxu0 0.0
    %749 = vmatpush1.msra.mxu0 0.0
    %750 = vmatprep.subr.mxu0 0.0
    %751 = vmatpush1.msra.mxu0 0.0
    %752 = vmatprep.subr.mxu0 0.0
    %753 = vmatpush1.msra.mxu0 0.0
    %754 = vmatprep.subr.mxu0 0.0
    %755 = vmatpush1.msra.mxu0 0.0
    %756 = vmatprep.subr.mxu0 0.0
    %757 = vmatpush1.msra.mxu0 0.0
    %758 = vmatprep.subr.mxu0 0.0
    %759 = vmatpush1.msra.mxu0 0.0
    %760 = vmatprep.subr.mxu0 0.0
    %761 = vmatpush1.msra.mxu0 0.0
    %762 = vmatprep.subr.mxu0 0.0
    %763 = vmatpush1.msra.mxu0 0.0
    %764 = vmatprep.subr.mxu0 0.0
    %765 = vmatpush1.msra.mxu0 0.0
    %766 = vmatprep.subr.mxu0 0.0
    %767 = vmatpush1.msra.mxu0 0.0
    %768 = vmatprep.subr.mxu0 0.0
    %769 = vmatpush1.msra.mxu0 0.0
    %770 = vmatprep.subr.mxu0 0.0
    %771 = vmatpush1.msra.mxu0 0.0
    %772 = vmatprep.subr.mxu0 0.0
    %773 = vmatpush1.msra.mxu0 0.0
    %774 = vmatprep.subr.mxu0 0.0
    %775 = vmatpush1.msra.mxu0 0.0
    %776 = vmatprep.subr.mxu0 0.0
    %777 = vmatpush1.msra.mxu0 0.0
    %778 = vmatprep.subr.mxu0 0.0
    %779 = vmatpush1.msra.mxu0 0.0
    %780 = vmatprep.subr.mxu0 0.0
    %781 = vmatpush1.msra.mxu0 0.0
    %782 = vmatprep.subr.mxu0 0.0
    %783 = vmatpush1.msra.mxu0 0.0
    %784 = vmatprep.mubr.f32.mxu0 0.0
    %785 = vmatmul.mubr.f32.gmra.mrb[0].mxu0 %v718
    %v786 = vpop.f32.mrb[0].mxu0
    %v787 = vadd.f32 0.0, %v786
    %v788 = vpop.f32.mrb[0].mxu0
    %789 = vdwg.mxu0
    %v790 = vadd.f32 %v713, %v787
    %v791 = vxor.u32 %v790, 2147483648
    %v792 = vmul.f32 %v791, 1.442695
    %v793 = vpow.pop %v792
    %v794 = vadd.f32 %v793, 1.0
    %v795 = vrcp.pop %v794
    %v796 = vmul.f32 1.0, %v795
    %v797 = vtanh.pop %v790
    %v798 = vmul.f32 %v796, %v699
    %800 = vrot.lane.b32.xlu0 %v797, 64
    %v801 = vpop.permute.xlu0 %800
    %v803 = vmul.f32 %v796, %v801
    %805 = vrot.lane.b32.xlu0 %v803, 32
    %v806 = vpop.permute.xlu0 %805
    %v808 = vadd.f32 %v798, %v806
    %v809 = vtanh.pop %v808
    %811 = vrot.lane.b32.xlu0 %v809, 64
    %v812 = vpop.permute.xlu0 %811
    %v814 = vmul.f32 %v796, %v812
    %816 = vrot.lane.b32.xlu0 %v814, 32
    %v817 = vpop.permute.xlu0 %816
    %s819 = scalar_lea.vmem [#allocation9], 12
    %820 = vst.msk [vmem:[%s819] sm:$0x3] %vm165, %v817
    %s821 = scalar_lea.vmem [#allocation4], 14
    %v822 = vld [vmem:[%s821] sm:$0x3]
    %v823 = vld [vmem:[#allocation7] sm:$0xff]
    %v824 = vld [vmem:[#allocation7 + $0x8] sm:$0xff]
    %v825 = vld [vmem:[#allocation7 + $0x10] sm:$0xff]
    %v826 = vld [vmem:[#allocation7 + $0x18] sm:$0xff]
    %v827 = vsel %vm58, %v817, 0
    %829 = vmatprep.subr.mxu0 0.0
    %830 = vmatpush1.msra.mxu0 %v823
    %831 = vmatprep.subr.mxu0 0.0
    %832 = vmatpush1.msra.mxu0 %v824
    %833 = vmatprep.subr.mxu0 0.0
    %834 = vmatpush1.msra.mxu0 %v825
    %835 = vmatprep.subr.mxu0 0.0
    %836 = vmatpush1.msra.mxu0 %v826
    %837 = vmatprep.subr.mxu0 0.0
    %838 = vmatpush1.msra.mxu0 0.0
    %839 = vmatprep.subr.mxu0 0.0
    %840 = vmatpush1.msra.mxu0 0.0
    %841 = vmatprep.subr.mxu0 0.0
    %842 = vmatpush1.msra.mxu0 0.0
    %843 = vmatprep.subr.mxu0 0.0
    %844 = vmatpush1.msra.mxu0 0.0
    %845 = vmatprep.subr.mxu0 0.0
    %846 = vmatpush1.msra.mxu0 0.0
    %847 = vmatprep.subr.mxu0 0.0
    %848 = vmatpush1.msra.mxu0 0.0
    %849 = vmatprep.subr.mxu0 0.0
    %850 = vmatpush1.msra.mxu0 0.0
    %851 = vmatprep.subr.mxu0 0.0
    %852 = vmatpush1.msra.mxu0 0.0
    %853 = vmatprep.subr.mxu0 0.0
    %854 = vmatpush1.msra.mxu0 0.0
    %855 = vmatprep.subr.mxu0 0.0
    %856 = vmatpush1.msra.mxu0 0.0
    %857 = vmatprep.subr.mxu0 0.0
    %858 = vmatpush1.msra.mxu0 0.0
    %859 = vmatprep.subr.mxu0 0.0
    %860 = vmatpush1.msra.mxu0 0.0
    %861 = vmatprep.subr.mxu0 0.0
    %862 = vmatpush1.msra.mxu0 0.0
    %863 = vmatprep.subr.mxu0 0.0
    %864 = vmatpush1.msra.mxu0 0.0
    %865 = vmatprep.subr.mxu0 0.0
    %866 = vmatpush1.msra.mxu0 0.0
    %867 = vmatprep.subr.mxu0 0.0
    %868 = vmatpush1.msra.mxu0 0.0
    %869 = vmatprep.subr.mxu0 0.0
    %870 = vmatpush1.msra.mxu0 0.0
    %871 = vmatprep.subr.mxu0 0.0
    %872 = vmatpush1.msra.mxu0 0.0
    %873 = vmatprep.subr.mxu0 0.0
    %874 = vmatpush1.msra.mxu0 0.0
    %875 = vmatprep.subr.mxu0 0.0
    %876 = vmatpush1.msra.mxu0 0.0
    %877 = vmatprep.subr.mxu0 0.0
    %878 = vmatpush1.msra.mxu0 0.0
    %879 = vmatprep.subr.mxu0 0.0
    %880 = vmatpush1.msra.mxu0 0.0
    %881 = vmatprep.subr.mxu0 0.0
    %882 = vmatpush1.msra.mxu0 0.0
    %883 = vmatprep.subr.mxu0 0.0
    %884 = vmatpush1.msra.mxu0 0.0
    %885 = vmatprep.subr.mxu0 0.0
    %886 = vmatpush1.msra.mxu0 0.0
    %887 = vmatprep.subr.mxu0 0.0
    %888 = vmatpush1.msra.mxu0 0.0
    %889 = vmatprep.subr.mxu0 0.0
    %890 = vmatpush1.msra.mxu0 0.0
    %891 = vmatprep.subr.mxu0 0.0
    %892 = vmatpush1.msra.mxu0 0.0
    %893 = vmatprep.mubr.f32.mxu0 0.0
    %894 = vmatmul.mubr.f32.gmra.mrb[0].mxu0 %v827
    %v895 = vpop.f32.mrb[0].mxu0
    %v896 = vadd.f32 0.0, %v895
    %v897 = vpop.f32.mrb[0].mxu0
    %898 = vdwg.mxu0
    %v899 = vadd.f32 %v822, %v896
    %v900 = vxor.u32 %v899, 2147483648
    %v901 = vmul.f32 %v900, 1.442695
    %v902 = vpow.pop %v901
    %v903 = vadd.f32 %v902, 1.0
    %v904 = vrcp.pop %v903
    %v905 = vmul.f32 1.0, %v904
    %v906 = vtanh.pop %v899
    %v907 = vmul.f32 %v905, %v808
    %909 = vrot.lane.b32.xlu0 %v906, 64
    %v910 = vpop.permute.xlu0 %909
    %v912 = vmul.f32 %v905, %v910
    %914 = vrot.lane.b32.xlu0 %v912, 32
    %v915 = vpop.permute.xlu0 %914
    %v917 = vadd.f32 %v907, %v915
    %v918 = vtanh.pop %v917
    %920 = vrot.lane.b32.xlu0 %v918, 64
    %v921 = vpop.permute.xlu0 %920
    %v923 = vmul.f32 %v905, %v921
    %925 = vrot.lane.b32.xlu0 %v923, 32
    %v926 = vpop.permute.xlu0 %925
    %s928 = scalar_lea.vmem [#allocation9], 14
    %929 = vst.msk [vmem:[%s928] sm:$0x3] %vm165, %v926
    %930 = vst.msk [vmem:[#allocation2] sm:$0x3] %vm165, %v926
    %932 = vrot.lane.b32.xlu0 %v917, 96
    %v933 = vpop.permute.xlu0 %932
    %935 = vst.msk [vmem:[#allocation3] sm:$0x3] %vm165, %v933
    // Predicated region
    $region22: #{tpu_custom_call.1} parent=1 // pred_check
      %p936 = pneg %p44
    $region23: #{tpu_custom_call.1} parent=1 // pred_check_branch
      %938 = sbr.rel (%p936) target = $region25
    $region24: #{tpu_custom_call.1} parent=1 // pred_region
      %939 = vst.msk [vmem:[#allocation10] sm:$0x3] %vm165, %v926
      %940 = vst.msk [vmem:[#allocation12] sm:$0x3] %vm165, %v933
    $region25: #{tpu_custom_call.1} parent=1 // pred_fallthru
      _
    // Predicated region
    $region26: #{tpu_custom_call.1} parent=1 // pred_check
      _
    $region27: #{tpu_custom_call.1} parent=1 // pred_check_branch
      %942 = sbr.rel (0) target = $region29
    $region28: #{tpu_custom_call.1} parent=1 // pred_region
      %s944 = ssub.s32 256, 256
      %945 = vsyncadd [#allocation6], %s944
      %s946 = sshll.u32 [#allocation9], 4
      %s947 = int_to_ptr.vmem [resolvable:$true] %s946
      %952 = dma.vmem_to_hbm [thread:$0]  %s947, 256, %s2, [#allocation6], 32, 32, 2
    $region29: #{tpu_custom_call.1} parent=1 // pred_fallthru
      _
    // Predicated region
    $region30: #{tpu_custom_call.1} parent=1 // pred_check
      _
    $region31: #{tpu_custom_call.1} parent=1 // pred_check_branch
      %954 = sbr.rel (0) target = $region33
    $region32: #{tpu_custom_call.1} parent=1 // pred_region
      %s956 = ssub.s32 32, 32
      %957 = vsyncadd [#allocation11], %s956
      %s959 = sshll.u32 [#allocation10], 4
      %s960 = int_to_ptr.vmem [resolvable:$true] %s959
      %962 = dma.vmem_to_hbm [thread:$0]  %s960, 32, %s3, [#allocation11]
    $region33: #{tpu_custom_call.1} parent=1 // pred_fallthru
      _
    // Predicated region
    $region34: #{tpu_custom_call.1} parent=1 // pred_check
      _
    $region35: #{tpu_custom_call.1} parent=1 // pred_check_branch
      %964 = sbr.rel (0) target = $region37
    $region36: #{tpu_custom_call.1} parent=1 // pred_region
      %s966 = ssub.s32 32, 32
      %967 = vsyncadd [#allocation11], %s966
      %s969 = sshll.u32 [#allocation12], 4
      %s970 = int_to_ptr.vmem [resolvable:$true] %s969
      %972 = dma.vmem_to_hbm [thread:$0]  %s970, 32, %s4, [#allocation11]
    $region37: #{tpu_custom_call.1} parent=1 // pred_fallthru
      _
    // Predicated region
    $region38: #{tpu_custom_call.1} parent=1 // pred_check
      _
    $region39: #{tpu_custom_call.1} parent=1 // pred_check_branch
      %974 = sbr.rel (0) target = $region41
    $region40: #{tpu_custom_call.1} parent=1 // pred_region
      %975 = dma.done [#allocation6], 256
    $region41: #{tpu_custom_call.1} parent=1 // pred_fallthru
      _
    // Predicated region
    $region42: #{tpu_custom_call.1} parent=1 // pred_check
      _
    $region43: #{tpu_custom_call.1} parent=1 // pred_check_branch
      %977 = sbr.rel (0) target = $region45
    $region44: #{tpu_custom_call.1} parent=1 // pred_region
      %978 = dma.done [#allocation11], 32
    $region45: #{tpu_custom_call.1} parent=1 // pred_fallthru
      _
    // Predicated region
    $region46: #{tpu_custom_call.1} parent=1 // pred_check
      _
    $region47: #{tpu_custom_call.1} parent=1 // pred_check_branch
      %980 = sbr.rel (0) target = $region49
    $region48: #{tpu_custom_call.1} parent=1 // pred_region
      %981 = dma.done [#allocation11], 32
    $region49: #{tpu_custom_call.1} parent=1 // pred_fallthru
      _
    %982 = vsyncpa [#allocation5], 1
    %983 = vsyncpa [#allocation8], 1
    %984 = vsyncpa [#allocation6], 1
    %985 = vsyncpa [#allocation11], 1

</llo_original>
